<compile_context>
chip_gen: v5e
topology: v5e:2x2
jax: 0.10.0
libtpu: 0.0.40
codegen_flags: <defaults>
</compile_context>

<pallas_src>
import functools
import math

import jax
import jax.numpy as jnp
from jax.experimental import pallas as pl
from jax.experimental.pallas import tpu as pltpu


# ----------------------------- in-kernel math helpers -----------------------------

def _stable_layer_norm(t, g, eps=1e-5):
    # x = x / x.amax(-1, keepdim=True); then bias-free LN with gamma g.
    t = t / jnp.max(t, axis=-1, keepdims=True)
    mean = jnp.mean(t, axis=-1, keepdims=True)
    var = jnp.mean(jnp.square(t - mean), axis=-1, keepdims=True)
    return (t - mean) * jax.lax.rsqrt(var + eps) * g


def _l2norm(t, eps=1e-12):
    # F.normalize(t, dim=-1) == t * rsqrt(max(sum(t^2), eps^2))   (rsqrt -> EUP)
    ss = jnp.sum(t * t, axis=-1, keepdims=True)
    return t * jax.lax.rsqrt(jnp.maximum(ss, eps * eps))


# ----------------------------------- kernel ---------------------------------------

def cross_attention_kernel(x_ref, ctx_ref, mask_ref,
                           wq_ref, wk_ref, wv_ref, wo_ref,
                           nk_ref, nv_ref, qs_ref, ks_ref,
                           g_in_ref, g_out_ref,
                           o_ref, *, heads, dim_head, n_tok, m_tok, b_blk,
                           compute_dtype):
    # x_ref:    (b_blk*N, D)   queries, batch folded into rows
    # ctx_ref:  (b_blk*M, Dc)  context, batch folded into rows
    # mask_ref: (b_blk, M)     1.0 = attend, 0.0 = masked (null slot always attends)
    # wq_ref: (H, D, dh)  wk/wv_ref: (H, Dc, dh)  wo_ref: (H, dh, D)   head-major
    dim = x_ref.shape[-1]
    rows_q = b_blk * n_tok

    x = x_ref[...].astype(jnp.float32)                          # (Rq, D)
    xn = _stable_layer_norm(x, g_in_ref[...])                   # self.norm(x)
    xn_c = xn.astype(compute_dtype)
    ctx_c = ctx_ref[...].astype(compute_dtype)                  # norm_context=False

    mask = mask_ref[...] > 0.5                                  # (b_blk, M)
    mask_e = mask[:, None, :]                                   # (b_blk, 1, M)
    neg_max = -jnp.finfo(jnp.float32).max

    qs = qs_ref[...]                                            # (1, dh), includes * scale
    ks = ks_ref[...]                                            # (1, dh)
    # Null-K slot: l2norm + k_scale once (shared by all heads / batches).  Rounded to
    # the matmul dtype so its precision matches the real keys.
    nk = (_l2norm(nk_ref[...]) * ks).astype(compute_dtype).astype(jnp.float32)  # (1, dh)
    nv = nv_ref[...]                                            # (1, dh) f32

    acc = jnp.zeros((rows_q, dim), jnp.float32)
    # Static head loop over head-major weights: leading-axis indexing only, no lane
    # slices, no per-head concats.
    # TODO(synk): fuse heads into a single block-diagonal score matmul if head count grows.
    for h in range(heads):
        qh = jnp.dot(xn_c, wq_ref[h], preferred_element_type=jnp.float32)   # (Rq, dh)
        kh = jnp.dot(ctx_c, wk_ref[h], preferred_element_type=jnp.float32)  # (Rk, dh)
        vh = jnp.dot(ctx_c, wv_ref[h], preferred_element_type=jnp.float32)  # (Rk, dh)

        qh = (_l2norm(qh) * qs).astype(compute_dtype)   # q_scale carries `scale`
        kh = (_l2norm(kh) * ks).astype(compute_dtype)

        # Null-slot logit q . nk (bf16-rounded operands, f32 products/accumulate:
        # same numerics as the MXU path, no 9-row concat needed).
        sim_null = jnp.sum(qh.astype(jnp.float32) * nk, axis=-1, keepdims=True)  # (Rq,1)

        qb = qh.reshape(b_blk, n_tok, dim_head)
        kb = kh.reshape(b_blk, m_tok, dim_head)
        vb = vh.astype(compute_dtype).reshape(b_blk, m_tok, dim_head)
        sn = sim_null.reshape(b_blk, n_tok, 1)

        sim = jnp.einsum('bnd,bmd->bnm', qb, kb,
                         preferred_element_type=jnp.float32)    # (b, N, M)
        sim = jnp.where(mask_e, sim, neg_max)

        # Softmax over the (M context + 1 null) columns, null handled analytically.
        row_max = jnp.maximum(jnp.max(sim, axis=-1, keepdims=True), sn)
        p = jnp.exp(sim - row_max)                               # masked cols -> 0
        p_null = jnp.exp(sn - row_max)
        denom = jnp.sum(p, axis=-1, keepdims=True) + p_null
        inv = pl.reciprocal(denom, approx=True)                  # EUP, not VPU divide
        attn = p * inv
        attn_null = p_null * inv

        oh = jnp.einsum('bnm,bmd->bnd', attn.astype(compute_dtype), vb,
                        preferred_element_type=jnp.float32)      # (b, N, dh)
        oh = oh + attn_null * nv                                 # null value contribution

        # Output projection accumulated per head (out @ Wo == sum_h oh_h @ Wo[h]).
        acc = acc + jnp.dot(oh.reshape(rows_q, dim_head).astype(compute_dtype),
                            wo_ref[h], preferred_element_type=jnp.float32)

    o_ref[...] = _stable_layer_norm(acc, g_out_ref[...]).astype(o_ref.dtype)


# ----------------------------------- wrapper ---------------------------------------

def cross_attention(x, context, params, mask=None, *, heads, dim_head, scale,
                    compute_dtype=jnp.bfloat16, batch_block=None):
    B, N, D = x.shape
    _, M, Dc = context.shape

    # Coalesce batches per grid step (amortize ~0.35us/step pipeline overhead, widen the
    # MXU row dimension); the block axis stays "parallel" so v7x can shard blocks.
    if batch_block is None:
        batch_block = 1
        for cand in range(B, 0, -1):
            if B % cand == 0 and cand * max(N, M) <= 512:
                batch_block = cand
                break
    assert B % batch_block == 0
    num_blocks = B // batch_block

    # Fold batch into the row axis (free, wrapper-side reshape).
    x2 = x.reshape(B * N, D)
    ctx2 = context.reshape(B * M, Dc)

    if mask is None:
        mask2 = jnp.ones((B, M), jnp.float32)
    else:
        mask2 = mask.astype(jnp.float32)

    cd = compute_dtype
    # Head-major weights (H, in, dh) / (H, dh, D); bf16 halves weight DMA bytes and
    # feeds the MXU its peak dtype (f32 accumulation inside the kernel).
    wq_h = params["wq"].reshape(D, heads, dim_head).transpose(1, 0, 2).astype(cd)
    wk_h = params["wk"].reshape(Dc, heads, dim_head).transpose(1, 0, 2).astype(cd)
    wv_h = params["wv"].reshape(Dc, heads, dim_head).transpose(1, 0, 2).astype(cd)
    wo_h = params["wo"].reshape(heads, dim_head, D).astype(cd)

    # Fold the attention `scale` into q_scale (scale is applied to every column,
    # including the null column, so this is exact).
    qs_scaled = (params["qs"] * jnp.float32(scale)).astype(jnp.float32)

    kern = functools.partial(cross_attention_kernel,
                             heads=heads, dim_head=dim_head,
                             n_tok=N, m_tok=M, b_blk=batch_block,
                             compute_dtype=cd)

    rq, rk = batch_block * N, batch_block * M
    const2 = lambda b: (0, 0)
    const3 = lambda b: (0, 0, 0)

    out2 = pl.pallas_call(
        kern,
        out_shape=jax.ShapeDtypeStruct((B * N, D), jnp.float32),
        grid_spec=pltpu.PrefetchScalarGridSpec(
            num_scalar_prefetch=0,
            grid=(num_blocks,),
            in_specs=[
                pl.BlockSpec((rq, D), lambda b: (b, 0)),            # x rows
                pl.BlockSpec((rk, Dc), lambda b: (b, 0)),           # context rows
                pl.BlockSpec((batch_block, M), lambda b: (b, 0)),   # mask
                # Loop-invariant parameter blocks (constant index maps).
                # TODO(synk): at production dims single-buffer these (pl.Buffered(1))
                # and add a second grid axis tiling N to fit v7x's 64 MiB VMEM.
                pl.BlockSpec((heads, D, dim_head), const3),         # Wq (head-major)
                pl.BlockSpec((heads, Dc, dim_head), const3),        # Wk
                pl.BlockSpec((heads, Dc, dim_head), const3),        # Wv
                pl.BlockSpec((heads, dim_head, D), const3),         # Wo
                pl.BlockSpec((1, dim_head), const2),                # null_k
                pl.BlockSpec((1, dim_head), const2),                # null_v
                pl.BlockSpec((1, dim_head), const2),                # q_scale * scale
                pl.BlockSpec((1, dim_head), const2),                # k_scale
                pl.BlockSpec((1, D), const2),                       # gamma (input LN)
                pl.BlockSpec((1, D), const2),                       # gamma (output LN)
            ],
            out_specs=pl.BlockSpec((rq, D), lambda b: (b, 0)),
        ),
        compiler_params=pltpu.CompilerParams(
            dimension_semantics=("parallel",)),   # v7x: shard batch blocks over 2 TCs
    )(x2, ctx2, mask2,
      wq_h, wk_h, wv_h, wo_h,
      params["nk"], params["nv"], qs_scaled, params["ks"],
      params["g_in"], params["g_out"])

    return out2.reshape(B, N, D)


# ------------------------- deterministic parameter init ----------------------------

def init_params(key, dim, context_dim, dim_head, heads):
    inner = heads * dim_head
    k1, k2, k3, k4, k5 = jax.random.split(key, 5)
    sq = 1.0 / math.sqrt(dim)
    sc = 1.0 / math.sqrt(context_dim)
    si = 1.0 / math.sqrt(inner)
    null_kv = jax.random.normal(k5, (2, dim_head), jnp.float32)
    return {
        # weights stored as (in_features, out_features)
        "wq": sq * jax.random.normal(k1, (dim, inner), jnp.float32),
        "wk": sc * jax.random.normal(k2, (context_dim, inner), jnp.float32),
        "wv": sc * jax.random.normal(k3, (context_dim, inner), jnp.float32),
        "wo": si * jax.random.normal(k4, (inner, dim), jnp.float32),
        "nk": null_kv[0:1],                    # (1, dh)
        "nv": null_kv[1:2],                    # (1, dh)
        "qs": jnp.ones((1, dim_head), jnp.float32),
        "ks": jnp.ones((1, dim_head), jnp.float32),
        "g_in": jnp.ones((1, dim), jnp.float32),
        "g_out": jnp.ones((1, dim), jnp.float32),
    }


# ------------------------------ pure-JAX reference ---------------------------------
# Structurally faithful to the torch module; the matmul operands are cast to the same
# compute dtype as the kernel so the comparison isolates kernel correctness.

def _ref_stable_ln(t, g, eps=1e-5):
    t = t / jnp.max(t, axis=-1, keepdims=True)
    mean = jnp.mean(t, axis=-1, keepdims=True)
    var = jnp.mean(jnp.square(t - mean), axis=-1, keepdims=True)
    return (t - mean) * jax.lax.rsqrt(var + eps) * g


def cross_attention_ref(x, context, params, mask, *, heads, dim_head, scale,
                        compute_dtype=jnp.float32):
    B, N, D = x.shape
    cd = compute_dtype
    xn = _ref_stable_ln(x.astype(jnp.float32), params["g_in"][0])
    q = jnp.dot(xn.astype(cd), params["wq"].astype(cd),
                preferred_element_type=jnp.float32)
    k = jnp.dot(context.astype(cd), params["wk"].astype(cd),
                preferred_element_type=jnp.float32)
    v = jnp.dot(context.astype(cd), params["wv"].astype(cd),
                preferred_element_type=jnp.float32)

    def split(t):
        return t.reshape(B, -1, heads, dim_head).transpose(0, 2, 1, 3)

    q, k, v = map(split, (q, k, v))
    nk = jnp.broadcast_to(params["nk"].reshape(1, 1, 1, dim_head), (B, heads, 1, dim_head))
    nv = jnp.broadcast_to(params["nv"].reshape(1, 1, 1, dim_head), (B, heads, 1, dim_head))
    k = jnp.concatenate([nk, k], axis=2)
    v = jnp.concatenate([nv, v], axis=2)

    def l2n(t, eps=1e-12):
        ss = jnp.sum(t * t, axis=-1, keepdims=True)
        return t * jax.lax.rsqrt(jnp.maximum(ss, eps * eps))

    q = l2n(q) * params["qs"][0]
    k = l2n(k) * params["ks"][0]
    sim = jnp.einsum('bhid,bhjd->bhij', q.astype(cd), k.astype(cd),
                     preferred_element_type=jnp.float32) * scale
    if mask is not None:
        m = jnp.concatenate([jnp.ones((B, 1), bool), mask], axis=1)
        sim = jnp.where(m[:, None, None, :], sim, -jnp.finfo(jnp.float32).max)
    attn = jax.nn.softmax(sim, axis=-1)
    out = jnp.einsum('bhij,bhjd->bhid', attn.astype(cd), v.astype(cd),
                     preferred_element_type=jnp.float32)
    out = out.transpose(0, 2, 1, 3).reshape(B, N, heads * dim_head)
    out = jnp.dot(out.astype(cd), params["wo"].astype(cd),
                  preferred_element_type=jnp.float32)
    return _ref_stable_ln(out, params["g_out"][0])


# ----------------------------------- main -------------------------------------------

if __name__ == "__main__":
    B, N, M = 2, 16, 8          # batch, query tokens, context tokens
    DIM, CTX_DIM = 32, 32
    HEADS, DIM_HEAD, SCALE = 4, 16, 8

    key = jax.random.PRNGKey(0)
    kx, kc, kp = jax.random.split(key, 3)
    x = jax.random.normal(kx, (B, N, DIM), jnp.float32)
    context = jax.random.normal(kc, (B, M, CTX_DIM), jnp.float32)
    # deterministic mask: last two context tokens of batch 1 are masked out
    mask = jnp.ones((B, M), bool).at[1, -2:].set(False)

    params = init_params(kp, DIM, CTX_DIM, DIM_HEAD, HEADS)

    out = cross_attention(x, context, params, mask,
                          heads=HEADS, dim_head=DIM_HEAD, scale=SCALE,
                          compute_dtype=jnp.bfloat16)
    out = jax.block_until_ready(out)

    ref = cross_attention_ref(x, context, params, mask,
                              heads=HEADS, dim_head=DIM_HEAD, scale=SCALE,
                              compute_dtype=jnp.bfloat16)
    assert out.shape == (B, N, DIM)
    max_err = float(jnp.max(jnp.abs(out - ref)))
    assert jnp.allclose(out, ref, rtol=2e-2, atol=2e-2), max_err

    print("KERNEL_OK")
</pallas_src>

<mosaic_0001>
module attributes {stable_mosaic.version = 11 : i64} {
  func.func @cross_attention_kernel(%arg0: i32, %arg1: memref<32x32xf32, #tpu.memory_space<vmem>>, %arg2: memref<16x32xf32, #tpu.memory_space<vmem>>, %arg3: memref<2x8xf32, #tpu.memory_space<vmem>>, %arg4: memref<4x32x16xbf16, #tpu.memory_space<vmem>>, %arg5: memref<4x32x16xbf16, #tpu.memory_space<vmem>>, %arg6: memref<4x32x16xbf16, #tpu.memory_space<vmem>>, %arg7: memref<4x16x32xbf16, #tpu.memory_space<vmem>>, %arg8: memref<1x16xf32, #tpu.memory_space<vmem>>, %arg9: memref<1x16xf32, #tpu.memory_space<vmem>>, %arg10: memref<1x16xf32, #tpu.memory_space<vmem>>, %arg11: memref<1x16xf32, #tpu.memory_space<vmem>>, %arg12: memref<1x32xf32, #tpu.memory_space<vmem>>, %arg13: memref<1x32xf32, #tpu.memory_space<vmem>>, %arg14: memref<32x32xf32, #tpu.memory_space<vmem>>) attributes {dimension_semantics = [#tpu.dimension_semantics<parallel>], iteration_bounds = array<i64: 1>, scalar_prefetch = 0 : i64, scratch_operands = 0 : i64, tpu.core_type = #tpu.core_type<tc>, window_params = [{transform_indices = @transform_0, window_bounds = array<i64: 32, 32>}, {transform_indices = @transform_1, window_bounds = array<i64: 16, 32>}, {transform_indices = @transform_2, window_bounds = array<i64: 2, 8>}, {pipeline_mode = #tpu.pipeline_mode<synchronous>, transform_indices = @transform_3, window_bounds = array<i64: 4, 32, 16>}, {pipeline_mode = #tpu.pipeline_mode<synchronous>, transform_indices = @transform_4, window_bounds = array<i64: 4, 32, 16>}, {pipeline_mode = #tpu.pipeline_mode<synchronous>, transform_indices = @transform_5, window_bounds = array<i64: 4, 32, 16>}, {pipeline_mode = #tpu.pipeline_mode<synchronous>, transform_indices = @transform_6, window_bounds = array<i64: 4, 16, 32>}, {pipeline_mode = #tpu.pipeline_mode<synchronous>, transform_indices = @transform_7, window_bounds = array<i64: 1, 16>}, {pipeline_mode = #tpu.pipeline_mode<synchronous>, transform_indices = @transform_8, window_bounds = array<i64: 1, 16>}, {pipeline_mode = #tpu.pipeline_mode<synchronous>, transform_indices = @transform_9, window_bounds = array<i64: 1, 16>}, {pipeline_mode = #tpu.pipeline_mode<synchronous>, transform_indices = @transform_10, window_bounds = array<i64: 1, 16>}, {pipeline_mode = #tpu.pipeline_mode<synchronous>, transform_indices = @transform_11, window_bounds = array<i64: 1, 32>}, {pipeline_mode = #tpu.pipeline_mode<synchronous>, transform_indices = @transform_12, window_bounds = array<i64: 1, 32>}, {transform_indices = @transform_13, window_bounds = array<i64: 32, 32>}]} {
    %c0 = arith.constant 0 : index
    %c0_0 = arith.constant 0 : index
    %0 = vector.load %arg1[%c0, %c0_0] : memref<32x32xf32, #tpu.memory_space<vmem>>, vector<32x32xf32>
    %c0_1 = arith.constant 0 : index
    %c0_2 = arith.constant 0 : index
    %1 = vector.load %arg12[%c0_1, %c0_2] : memref<1x32xf32, #tpu.memory_space<vmem>>, vector<1x32xf32>
    %cst = arith.constant dense<0xFF800000> : vector<32xf32>
    %2 = vector.multi_reduction <maximumf>, %0, %cst [1] : vector<32x32xf32> to vector<32xf32>
    %3 = vector.shape_cast %2 : vector<32xf32> to vector<32x1xf32>
    %4 = vector.broadcast %3 : vector<32x1xf32> to vector<32x32xf32>
    %5 = arith.divf %0, %4 : vector<32x32xf32>
    %cst_3 = arith.constant dense<0.000000e+00> : vector<32xf32>
    %6 = vector.multi_reduction <add>, %5, %cst_3 [1] : vector<32x32xf32> to vector<32xf32>
    %7 = vector.shape_cast %6 : vector<32xf32> to vector<32x1xf32>
    %cst_4 = arith.constant 3.200000e+01 : f32
    %8 = vector.broadcast %cst_4 : f32 to vector<32x1xf32>
    %9 = arith.divf %7, %8 : vector<32x1xf32>
    %10 = vector.broadcast %9 : vector<32x1xf32> to vector<32x32xf32>
    %11 = arith.subf %5, %10 : vector<32x32xf32>
    %12 = arith.mulf %11, %11 : vector<32x32xf32>
    %cst_5 = arith.constant dense<0.000000e+00> : vector<32xf32>
    %13 = vector.multi_reduction <add>, %12, %cst_5 [1] : vector<32x32xf32> to vector<32xf32>
    %14 = vector.shape_cast %13 : vector<32xf32> to vector<32x1xf32>
    %cst_6 = arith.constant 3.200000e+01 : f32
    %15 = vector.broadcast %cst_6 : f32 to vector<32x1xf32>
    %16 = arith.divf %14, %15 : vector<32x1xf32>
    %17 = vector.broadcast %9 : vector<32x1xf32> to vector<32x32xf32>
    %18 = arith.subf %5, %17 : vector<32x32xf32>
    %cst_7 = arith.constant 9.99999974E-6 : f32
    %19 = vector.broadcast %cst_7 : f32 to vector<32x1xf32>
    %20 = arith.addf %16, %19 : vector<32x1xf32>
    %21 = math.rsqrt %20 : vector<32x1xf32>
    %22 = vector.broadcast %21 : vector<32x1xf32> to vector<32x32xf32>
    %23 = arith.mulf %18, %22 : vector<32x32xf32>
    %24 = vector.broadcast %1 : vector<1x32xf32> to vector<32x32xf32>
    %25 = arith.mulf %23, %24 : vector<32x32xf32>
    %26 = arith.truncf %25 : vector<32x32xf32> to vector<32x32xbf16>
    %c0_8 = arith.constant 0 : index
    %c0_9 = arith.constant 0 : index
    %27 = vector.load %arg2[%c0_8, %c0_9] : memref<16x32xf32, #tpu.memory_space<vmem>>, vector<16x32xf32>
    %28 = arith.truncf %27 : vector<16x32xf32> to vector<16x32xbf16>
    %c0_10 = arith.constant 0 : index
    %c0_11 = arith.constant 0 : index
    %29 = vector.load %arg3[%c0_10, %c0_11] : memref<2x8xf32, #tpu.memory_space<vmem>>, vector<2x8xf32>
    %cst_12 = arith.constant 5.000000e-01 : f32
    %30 = vector.broadcast %cst_12 : f32 to vector<2x8xf32>
    %31 = arith.cmpf ogt, %29, %30 : vector<2x8xf32>
    %32 = vector.shape_cast %31 : vector<2x8xi1> to vector<2x1x8xi1>
    %c0_13 = arith.constant 0 : index
    %c0_14 = arith.constant 0 : index
    %33 = vector.load %arg10[%c0_13, %c0_14] : memref<1x16xf32, #tpu.memory_space<vmem>>, vector<1x16xf32>
    %c0_15 = arith.constant 0 : index
    %c0_16 = arith.constant 0 : index
    %34 = vector.load %arg11[%c0_15, %c0_16] : memref<1x16xf32, #tpu.memory_space<vmem>>, vector<1x16xf32>
    %c0_17 = arith.constant 0 : index
    %c0_18 = arith.constant 0 : index
    %35 = vector.load %arg8[%c0_17, %c0_18] : memref<1x16xf32, #tpu.memory_space<vmem>>, vector<1x16xf32>
    %36 = arith.mulf %35, %35 : vector<1x16xf32>
    %cst_19 = arith.constant dense<0.000000e+00> : vector<1xf32>
    %37 = vector.multi_reduction <add>, %36, %cst_19 [1] : vector<1x16xf32> to vector<1xf32>
    %38 = vector.shape_cast %37 : vector<1xf32> to vector<1x1xf32>
    %cst_20 = arith.constant 1.000000e-24 : f32
    %39 = vector.broadcast %cst_20 : f32 to vector<1x1xf32>
    %40 = arith.maximumf %38, %39 : vector<1x1xf32>
    %41 = math.rsqrt %40 : vector<1x1xf32>
    %42 = vector.broadcast %41 : vector<1x1xf32> to vector<1x16xf32>
    %43 = arith.mulf %35, %42 : vector<1x16xf32>
    %44 = arith.mulf %43, %34 : vector<1x16xf32>
    %45 = arith.truncf %44 : vector<1x16xf32> to vector<1x16xbf16>
    %46 = arith.extf %45 : vector<1x16xbf16> to vector<1x16xf32>
    %c0_21 = arith.constant 0 : index
    %c0_22 = arith.constant 0 : index
    %47 = vector.load %arg9[%c0_21, %c0_22] : memref<1x16xf32, #tpu.memory_space<vmem>>, vector<1x16xf32>
    %cst_23 = arith.constant 0.000000e+00 : f32
    %48 = vector.broadcast %cst_23 : f32 to vector<32x32xf32>
    %c0_24 = arith.constant 0 : index
    %c0_25 = arith.constant 0 : index
    %c0_26 = arith.constant 0 : index
    %49 = vector.load %arg4[%c0_24, %c0_25, %c0_26] : memref<4x32x16xbf16, #tpu.memory_space<vmem>>, vector<1x32x16xbf16>
    %50 = vector.shape_cast %49 : vector<1x32x16xbf16> to vector<32x16xbf16>
    %cst_27 = arith.constant dense<0.000000e+00> : vector<32x16xf32>
    %51 = tpu.matmul %26, %50, %cst_27 {dimension_numbers = #tpu.dot_dimension_numbers<[1], [0], [0], [1], [0, 0, 1, 1], [], []>} : vector<32x32xbf16>, vector<32x16xbf16>, vector<32x16xf32> -> vector<32x16xf32>
    %c0_28 = arith.constant 0 : index
    %c0_29 = arith.constant 0 : index
    %c0_30 = arith.constant 0 : index
    %52 = vector.load %arg5[%c0_28, %c0_29, %c0_30] : memref<4x32x16xbf16, #tpu.memory_space<vmem>>, vector<1x32x16xbf16>
    %53 = vector.shape_cast %52 : vector<1x32x16xbf16> to vector<32x16xbf16>
    %cst_31 = arith.constant dense<0.000000e+00> : vector<16x16xf32>
    %54 = tpu.matmul %28, %53, %cst_31 {dimension_numbers = #tpu.dot_dimension_numbers<[1], [0], [0], [1], [0, 0, 1, 1], [], []>} : vector<16x32xbf16>, vector<32x16xbf16>, vector<16x16xf32> -> vector<16x16xf32>
    %c0_32 = arith.constant 0 : index
    %c0_33 = arith.constant 0 : index
    %c0_34 = arith.constant 0 : index
    %55 = vector.load %arg6[%c0_32, %c0_33, %c0_34] : memref<4x32x16xbf16, #tpu.memory_space<vmem>>, vector<1x32x16xbf16>
    %56 = vector.shape_cast %55 : vector<1x32x16xbf16> to vector<32x16xbf16>
    %cst_35 = arith.constant dense<0.000000e+00> : vector<16x16xf32>
    %57 = tpu.matmul %28, %56, %cst_35 {dimension_numbers = #tpu.dot_dimension_numbers<[1], [0], [0], [1], [0, 0, 1, 1], [], []>} : vector<16x32xbf16>, vector<32x16xbf16>, vector<16x16xf32> -> vector<16x16xf32>
    %58 = arith.mulf %51, %51 : vector<32x16xf32>
    %cst_36 = arith.constant dense<0.000000e+00> : vector<32xf32>
    %59 = vector.multi_reduction <add>, %58, %cst_36 [1] : vector<32x16xf32> to vector<32xf32>
    %60 = vector.shape_cast %59 : vector<32xf32> to vector<32x1xf32>
    %cst_37 = arith.constant 1.000000e-24 : f32
    %61 = vector.broadcast %cst_37 : f32 to vector<32x1xf32>
    %62 = arith.maximumf %60, %61 : vector<32x1xf32>
    %63 = math.rsqrt %62 : vector<32x1xf32>
    %64 = vector.broadcast %63 : vector<32x1xf32> to vector<32x16xf32>
    %65 = arith.mulf %51, %64 : vector<32x16xf32>
    %66 = vector.broadcast %33 : vector<1x16xf32> to vector<32x16xf32>
    %67 = arith.mulf %65, %66 : vector<32x16xf32>
    %68 = arith.truncf %67 : vector<32x16xf32> to vector<32x16xbf16>
    %69 = arith.mulf %54, %54 : vector<16x16xf32>
    %cst_38 = arith.constant dense<0.000000e+00> : vector<16xf32>
    %70 = vector.multi_reduction <add>, %69, %cst_38 [1] : vector<16x16xf32> to vector<16xf32>
    %71 = vector.shape_cast %70 : vector<16xf32> to vector<16x1xf32>
    %cst_39 = arith.constant 1.000000e-24 : f32
    %72 = vector.broadcast %cst_39 : f32 to vector<16x1xf32>
    %73 = arith.maximumf %71, %72 : vector<16x1xf32>
    %74 = math.rsqrt %73 : vector<16x1xf32>
    %75 = vector.broadcast %74 : vector<16x1xf32> to vector<16x16xf32>
    %76 = arith.mulf %54, %75 : vector<16x16xf32>
    %77 = vector.broadcast %34 : vector<1x16xf32> to vector<16x16xf32>
    %78 = arith.mulf %76, %77 : vector<16x16xf32>
    %79 = arith.truncf %78 : vector<16x16xf32> to vector<16x16xbf16>
    %80 = arith.extf %68 : vector<32x16xbf16> to vector<32x16xf32>
    %81 = vector.broadcast %46 : vector<1x16xf32> to vector<32x16xf32>
    %82 = arith.mulf %80, %81 : vector<32x16xf32>
    %cst_40 = arith.constant dense<0.000000e+00> : vector<32xf32>
    %83 = vector.multi_reduction <add>, %82, %cst_40 [1] : vector<32x16xf32> to vector<32xf32>
    %84 = vector.shape_cast %83 : vector<32xf32> to vector<32x1xf32>
    %85 = vector.shape_cast %68 : vector<32x16xbf16> to vector<2x16x16xbf16>
    %86 = vector.shape_cast %79 : vector<16x16xbf16> to vector<2x8x16xbf16>
    %87 = arith.truncf %57 : vector<16x16xf32> to vector<16x16xbf16>
    %88 = vector.shape_cast %87 : vector<16x16xbf16> to vector<2x8x16xbf16>
    %89 = vector.shape_cast %84 : vector<32x1xf32> to vector<2x16x1xf32>
    "tpu.trace_start"() <{level = 10 : i32, message = "bnd,bmd->bnm"}> : () -> ()
    %cst_41 = arith.constant dense<0.000000e+00> : vector<2x16x8xf32>
    %90 = tpu.matmul %85, %86, %cst_41 {dimension_numbers = #tpu.dot_dimension_numbers<[2], [2], [1], [1], [0, 0, 0, 1, 1, 1], [0], [0]>} : vector<2x16x16xbf16>, vector<2x8x16xbf16>, vector<2x16x8xf32> -> vector<2x16x8xf32>
    %cst_42 = arith.constant -3.40282347E+38 : f32
    "tpu.trace_stop"() : () -> ()
    %91 = vector.shape_cast %32 : vector<2x1x8xi1> to vector<2x1x8xi1>
    %92 = vector.broadcast %91 : vector<2x1x8xi1> to vector<2x16x8xi1>
    %93 = vector.broadcast %cst_42 : f32 to vector<2x16x8xf32>
    %94 = arith.select %92, %90, %93 : vector<2x16x8xi1>, vector<2x16x8xf32>
    %cst_43 = arith.constant dense<0xFF800000> : vector<2x16xf32>
    %95 = vector.multi_reduction <maximumf>, %94, %cst_43 [2] : vector<2x16x8xf32> to vector<2x16xf32>
    %96 = vector.shape_cast %95 : vector<2x16xf32> to vector<2x16x1xf32>
    %97 = arith.maximumf %96, %89 : vector<2x16x1xf32>
    %98 = vector.broadcast %97 : vector<2x16x1xf32> to vector<2x16x8xf32>
    %99 = arith.subf %94, %98 : vector<2x16x8xf32>
    %100 = math.exp %99 : vector<2x16x8xf32>
    %101 = arith.subf %89, %97 : vector<2x16x1xf32>
    %102 = math.exp %101 : vector<2x16x1xf32>
    %cst_44 = arith.constant dense<0.000000e+00> : vector<2x16xf32>
    %103 = vector.multi_reduction <add>, %100, %cst_44 [2] : vector<2x16x8xf32> to vector<2x16xf32>
    %104 = vector.shape_cast %103 : vector<2x16xf32> to vector<2x16x1xf32>
    %105 = arith.addf %104, %102 : vector<2x16x1xf32>
    %106 = tpu.reciprocal %105 {approx = true} : vector<2x16x1xf32> -> vector<2x16x1xf32>
    %107 = vector.broadcast %106 : vector<2x16x1xf32> to vector<2x16x8xf32>
    %108 = arith.mulf %100, %107 : vector<2x16x8xf32>
    %109 = arith.mulf %102, %106 : vector<2x16x1xf32>
    %110 = arith.truncf %108 : vector<2x16x8xf32> to vector<2x16x8xbf16>
    "tpu.trace_start"() <{level = 10 : i32, message = "bnm,bmd->bnd"}> : () -> ()
    %cst_45 = arith.constant dense<0.000000e+00> : vector<2x16x16xf32>
    %111 = tpu.matmul %110, %88, %cst_45 {dimension_numbers = #tpu.dot_dimension_numbers<[2], [1], [1], [2], [0, 0, 0, 1, 1, 2], [0], [0]>} : vector<2x16x8xbf16>, vector<2x8x16xbf16>, vector<2x16x16xf32> -> vector<2x16x16xf32>
    "tpu.trace_stop"() : () -> ()
    %112 = vector.shape_cast %47 : vector<1x16xf32> to vector<1x1x16xf32>
    %113 = vector.broadcast %109 : vector<2x16x1xf32> to vector<2x16x16xf32>
    %114 = vector.broadcast %112 : vector<1x1x16xf32> to vector<2x16x16xf32>
    %115 = arith.mulf %113, %114 : vector<2x16x16xf32>
    %116 = arith.addf %111, %115 : vector<2x16x16xf32>
    %117 = vector.shape_cast %116 : vector<2x16x16xf32> to vector<32x16xf32>
    %118 = arith.truncf %117 : vector<32x16xf32> to vector<32x16xbf16>
    %c0_46 = arith.constant 0 : index
    %c0_47 = arith.constant 0 : index
    %c0_48 = arith.constant 0 : index
    %119 = vector.load %arg7[%c0_46, %c0_47, %c0_48] : memref<4x16x32xbf16, #tpu.memory_space<vmem>>, vector<1x16x32xbf16>
    %120 = vector.shape_cast %119 : vector<1x16x32xbf16> to vector<16x32xbf16>
    %cst_49 = arith.constant dense<0.000000e+00> : vector<32x32xf32>
    %121 = tpu.matmul %118, %120, %cst_49 {dimension_numbers = #tpu.dot_dimension_numbers<[1], [0], [0], [1], [0, 0, 1, 1], [], []>} : vector<32x16xbf16>, vector<16x32xbf16>, vector<32x32xf32> -> vector<32x32xf32>
    %122 = arith.addf %48, %121 : vector<32x32xf32>
    %c1 = arith.constant 1 : index
    %c0_50 = arith.constant 0 : index
    %c0_51 = arith.constant 0 : index
    %123 = vector.load %arg4[%c1, %c0_50, %c0_51] : memref<4x32x16xbf16, #tpu.memory_space<vmem>>, vector<1x32x16xbf16>
    %124 = vector.shape_cast %123 : vector<1x32x16xbf16> to vector<32x16xbf16>
    %cst_52 = arith.constant dense<0.000000e+00> : vector<32x16xf32>
    %125 = tpu.matmul %26, %124, %cst_52 {dimension_numbers = #tpu.dot_dimension_numbers<[1], [0], [0], [1], [0, 0, 1, 1], [], []>} : vector<32x32xbf16>, vector<32x16xbf16>, vector<32x16xf32> -> vector<32x16xf32>
    %c1_53 = arith.constant 1 : index
    %c0_54 = arith.constant 0 : index
    %c0_55 = arith.constant 0 : index
    %126 = vector.load %arg5[%c1_53, %c0_54, %c0_55] : memref<4x32x16xbf16, #tpu.memory_space<vmem>>, vector<1x32x16xbf16>
    %127 = vector.shape_cast %126 : vector<1x32x16xbf16> to vector<32x16xbf16>
    %cst_56 = arith.constant dense<0.000000e+00> : vector<16x16xf32>
    %128 = tpu.matmul %28, %127, %cst_56 {dimension_numbers = #tpu.dot_dimension_numbers<[1], [0], [0], [1], [0, 0, 1, 1], [], []>} : vector<16x32xbf16>, vector<32x16xbf16>, vector<16x16xf32> -> vector<16x16xf32>
    %c1_57 = arith.constant 1 : index
    %c0_58 = arith.constant 0 : index
    %c0_59 = arith.constant 0 : index
    %129 = vector.load %arg6[%c1_57, %c0_58, %c0_59] : memref<4x32x16xbf16, #tpu.memory_space<vmem>>, vector<1x32x16xbf16>
    %130 = vector.shape_cast %129 : vector<1x32x16xbf16> to vector<32x16xbf16>
    %cst_60 = arith.constant dense<0.000000e+00> : vector<16x16xf32>
    %131 = tpu.matmul %28, %130, %cst_60 {dimension_numbers = #tpu.dot_dimension_numbers<[1], [0], [0], [1], [0, 0, 1, 1], [], []>} : vector<16x32xbf16>, vector<32x16xbf16>, vector<16x16xf32> -> vector<16x16xf32>
    %132 = arith.mulf %125, %125 : vector<32x16xf32>
    %cst_61 = arith.constant dense<0.000000e+00> : vector<32xf32>
    %133 = vector.multi_reduction <add>, %132, %cst_61 [1] : vector<32x16xf32> to vector<32xf32>
    %134 = vector.shape_cast %133 : vector<32xf32> to vector<32x1xf32>
    %cst_62 = arith.constant 1.000000e-24 : f32
    %135 = vector.broadcast %cst_62 : f32 to vector<32x1xf32>
    %136 = arith.maximumf %134, %135 : vector<32x1xf32>
    %137 = math.rsqrt %136 : vector<32x1xf32>
    %138 = vector.broadcast %137 : vector<32x1xf32> to vector<32x16xf32>
    %139 = arith.mulf %125, %138 : vector<32x16xf32>
    %140 = vector.broadcast %33 : vector<1x16xf32> to vector<32x16xf32>
    %141 = arith.mulf %139, %140 : vector<32x16xf32>
    %142 = arith.truncf %141 : vector<32x16xf32> to vector<32x16xbf16>
    %143 = arith.mulf %128, %128 : vector<16x16xf32>
    %cst_63 = arith.constant dense<0.000000e+00> : vector<16xf32>
    %144 = vector.multi_reduction <add>, %143, %cst_63 [1] : vector<16x16xf32> to vector<16xf32>
    %145 = vector.shape_cast %144 : vector<16xf32> to vector<16x1xf32>
    %cst_64 = arith.constant 1.000000e-24 : f32
    %146 = vector.broadcast %cst_64 : f32 to vector<16x1xf32>
    %147 = arith.maximumf %145, %146 : vector<16x1xf32>
    %148 = math.rsqrt %147 : vector<16x1xf32>
    %149 = vector.broadcast %148 : vector<16x1xf32> to vector<16x16xf32>
    %150 = arith.mulf %128, %149 : vector<16x16xf32>
    %151 = vector.broadcast %34 : vector<1x16xf32> to vector<16x16xf32>
    %152 = arith.mulf %150, %151 : vector<16x16xf32>
    %153 = arith.truncf %152 : vector<16x16xf32> to vector<16x16xbf16>
    %154 = arith.extf %142 : vector<32x16xbf16> to vector<32x16xf32>
    %155 = vector.broadcast %46 : vector<1x16xf32> to vector<32x16xf32>
    %156 = arith.mulf %154, %155 : vector<32x16xf32>
    %cst_65 = arith.constant dense<0.000000e+00> : vector<32xf32>
    %157 = vector.multi_reduction <add>, %156, %cst_65 [1] : vector<32x16xf32> to vector<32xf32>
    %158 = vector.shape_cast %157 : vector<32xf32> to vector<32x1xf32>
    %159 = vector.shape_cast %142 : vector<32x16xbf16> to vector<2x16x16xbf16>
    %160 = vector.shape_cast %153 : vector<16x16xbf16> to vector<2x8x16xbf16>
    %161 = arith.truncf %131 : vector<16x16xf32> to vector<16x16xbf16>
    %162 = vector.shape_cast %161 : vector<16x16xbf16> to vector<2x8x16xbf16>
    %163 = vector.shape_cast %158 : vector<32x1xf32> to vector<2x16x1xf32>
    "tpu.trace_start"() <{level = 10 : i32, message = "bnd,bmd->bnm"}> : () -> ()
    %cst_66 = arith.constant dense<0.000000e+00> : vector<2x16x8xf32>
    %164 = tpu.matmul %159, %160, %cst_66 {dimension_numbers = #tpu.dot_dimension_numbers<[2], [2], [1], [1], [0, 0, 0, 1, 1, 1], [0], [0]>} : vector<2x16x16xbf16>, vector<2x8x16xbf16>, vector<2x16x8xf32> -> vector<2x16x8xf32>
    %cst_67 = arith.constant -3.40282347E+38 : f32
    "tpu.trace_stop"() : () -> ()
    %165 = vector.shape_cast %32 : vector<2x1x8xi1> to vector<2x1x8xi1>
    %166 = vector.broadcast %165 : vector<2x1x8xi1> to vector<2x16x8xi1>
    %167 = vector.broadcast %cst_67 : f32 to vector<2x16x8xf32>
    %168 = arith.select %166, %164, %167 : vector<2x16x8xi1>, vector<2x16x8xf32>
    %cst_68 = arith.constant dense<0xFF800000> : vector<2x16xf32>
    %169 = vector.multi_reduction <maximumf>, %168, %cst_68 [2] : vector<2x16x8xf32> to vector<2x16xf32>
    %170 = vector.shape_cast %169 : vector<2x16xf32> to vector<2x16x1xf32>
    %171 = arith.maximumf %170, %163 : vector<2x16x1xf32>
    %172 = vector.broadcast %171 : vector<2x16x1xf32> to vector<2x16x8xf32>
    %173 = arith.subf %168, %172 : vector<2x16x8xf32>
    %174 = math.exp %173 : vector<2x16x8xf32>
    %175 = arith.subf %163, %171 : vector<2x16x1xf32>
    %176 = math.exp %175 : vector<2x16x1xf32>
    %cst_69 = arith.constant dense<0.000000e+00> : vector<2x16xf32>
    %177 = vector.multi_reduction <add>, %174, %cst_69 [2] : vector<2x16x8xf32> to vector<2x16xf32>
    %178 = vector.shape_cast %177 : vector<2x16xf32> to vector<2x16x1xf32>
    %179 = arith.addf %178, %176 : vector<2x16x1xf32>
    %180 = tpu.reciprocal %179 {approx = true} : vector<2x16x1xf32> -> vector<2x16x1xf32>
    %181 = vector.broadcast %180 : vector<2x16x1xf32> to vector<2x16x8xf32>
    %182 = arith.mulf %174, %181 : vector<2x16x8xf32>
    %183 = arith.mulf %176, %180 : vector<2x16x1xf32>
    %184 = arith.truncf %182 : vector<2x16x8xf32> to vector<2x16x8xbf16>
    "tpu.trace_start"() <{level = 10 : i32, message = "bnm,bmd->bnd"}> : () -> ()
    %cst_70 = arith.constant dense<0.000000e+00> : vector<2x16x16xf32>
    %185 = tpu.matmul %184, %162, %cst_70 {dimension_numbers = #tpu.dot_dimension_numbers<[2], [1], [1], [2], [0, 0, 0, 1, 1, 2], [0], [0]>} : vector<2x16x8xbf16>, vector<2x8x16xbf16>, vector<2x16x16xf32> -> vector<2x16x16xf32>
    "tpu.trace_stop"() : () -> ()
    %186 = vector.shape_cast %47 : vector<1x16xf32> to vector<1x1x16xf32>
    %187 = vector.broadcast %183 : vector<2x16x1xf32> to vector<2x16x16xf32>
    %188 = vector.broadcast %186 : vector<1x1x16xf32> to vector<2x16x16xf32>
    %189 = arith.mulf %187, %188 : vector<2x16x16xf32>
    %190 = arith.addf %185, %189 : vector<2x16x16xf32>
    %191 = vector.shape_cast %190 : vector<2x16x16xf32> to vector<32x16xf32>
    %192 = arith.truncf %191 : vector<32x16xf32> to vector<32x16xbf16>
    %c1_71 = arith.constant 1 : index
    %c0_72 = arith.constant 0 : index
    %c0_73 = arith.constant 0 : index
    %193 = vector.load %arg7[%c1_71, %c0_72, %c0_73] : memref<4x16x32xbf16, #tpu.memory_space<vmem>>, vector<1x16x32xbf16>
    %194 = vector.shape_cast %193 : vector<1x16x32xbf16> to vector<16x32xbf16>
    %cst_74 = arith.constant dense<0.000000e+00> : vector<32x32xf32>
    %195 = tpu.matmul %192, %194, %cst_74 {dimension_numbers = #tpu.dot_dimension_numbers<[1], [0], [0], [1], [0, 0, 1, 1], [], []>} : vector<32x16xbf16>, vector<16x32xbf16>, vector<32x32xf32> -> vector<32x32xf32>
    %196 = arith.addf %122, %195 : vector<32x32xf32>
    %c2 = arith.constant 2 : index
    %c0_75 = arith.constant 0 : index
    %c0_76 = arith.constant 0 : index
    %197 = vector.load %arg4[%c2, %c0_75, %c0_76] : memref<4x32x16xbf16, #tpu.memory_space<vmem>>, vector<1x32x16xbf16>
    %198 = vector.shape_cast %197 : vector<1x32x16xbf16> to vector<32x16xbf16>
    %cst_77 = arith.constant dense<0.000000e+00> : vector<32x16xf32>
    %199 = tpu.matmul %26, %198, %cst_77 {dimension_numbers = #tpu.dot_dimension_numbers<[1], [0], [0], [1], [0, 0, 1, 1], [], []>} : vector<32x32xbf16>, vector<32x16xbf16>, vector<32x16xf32> -> vector<32x16xf32>
    %c2_78 = arith.constant 2 : index
    %c0_79 = arith.constant 0 : index
    %c0_80 = arith.constant 0 : index
    %200 = vector.load %arg5[%c2_78, %c0_79, %c0_80] : memref<4x32x16xbf16, #tpu.memory_space<vmem>>, vector<1x32x16xbf16>
    %201 = vector.shape_cast %200 : vector<1x32x16xbf16> to vector<32x16xbf16>
    %cst_81 = arith.constant dense<0.000000e+00> : vector<16x16xf32>
    %202 = tpu.matmul %28, %201, %cst_81 {dimension_numbers = #tpu.dot_dimension_numbers<[1], [0], [0], [1], [0, 0, 1, 1], [], []>} : vector<16x32xbf16>, vector<32x16xbf16>, vector<16x16xf32> -> vector<16x16xf32>
    %c2_82 = arith.constant 2 : index
    %c0_83 = arith.constant 0 : index
    %c0_84 = arith.constant 0 : index
    %203 = vector.load %arg6[%c2_82, %c0_83, %c0_84] : memref<4x32x16xbf16, #tpu.memory_space<vmem>>, vector<1x32x16xbf16>
    %204 = vector.shape_cast %203 : vector<1x32x16xbf16> to vector<32x16xbf16>
    %cst_85 = arith.constant dense<0.000000e+00> : vector<16x16xf32>
    %205 = tpu.matmul %28, %204, %cst_85 {dimension_numbers = #tpu.dot_dimension_numbers<[1], [0], [0], [1], [0, 0, 1, 1], [], []>} : vector<16x32xbf16>, vector<32x16xbf16>, vector<16x16xf32> -> vector<16x16xf32>
    %206 = arith.mulf %199, %199 : vector<32x16xf32>
    %cst_86 = arith.constant dense<0.000000e+00> : vector<32xf32>
    %207 = vector.multi_reduction <add>, %206, %cst_86 [1] : vector<32x16xf32> to vector<32xf32>
    %208 = vector.shape_cast %207 : vector<32xf32> to vector<32x1xf32>
    %cst_87 = arith.constant 1.000000e-24 : f32
    %209 = vector.broadcast %cst_87 : f32 to vector<32x1xf32>
    %210 = arith.maximumf %208, %209 : vector<32x1xf32>
    %211 = math.rsqrt %210 : vector<32x1xf32>
    %212 = vector.broadcast %211 : vector<32x1xf32> to vector<32x16xf32>
    %213 = arith.mulf %199, %212 : vector<32x16xf32>
    %214 = vector.broadcast %33 : vector<1x16xf32> to vector<32x16xf32>
    %215 = arith.mulf %213, %214 : vector<32x16xf32>
    %216 = arith.truncf %215 : vector<32x16xf32> to vector<32x16xbf16>
    %217 = arith.mulf %202, %202 : vector<16x16xf32>
    %cst_88 = arith.constant dense<0.000000e+00> : vector<16xf32>
    %218 = vector.multi_reduction <add>, %217, %cst_88 [1] : vector<16x16xf32> to vector<16xf32>
    %219 = vector.shape_cast %218 : vector<16xf32> to vector<16x1xf32>
    %cst_89 = arith.constant 1.000000e-24 : f32
    %220 = vector.broadcast %cst_89 : f32 to vector<16x1xf32>
    %221 = arith.maximumf %219, %220 : vector<16x1xf32>
    %222 = math.rsqrt %221 : vector<16x1xf32>
    %223 = vector.broadcast %222 : vector<16x1xf32> to vector<16x16xf32>
    %224 = arith.mulf %202, %223 : vector<16x16xf32>
    %225 = vector.broadcast %34 : vector<1x16xf32> to vector<16x16xf32>
    %226 = arith.mulf %224, %225 : vector<16x16xf32>
    %227 = arith.truncf %226 : vector<16x16xf32> to vector<16x16xbf16>
    %228 = arith.extf %216 : vector<32x16xbf16> to vector<32x16xf32>
    %229 = vector.broadcast %46 : vector<1x16xf32> to vector<32x16xf32>
    %230 = arith.mulf %228, %229 : vector<32x16xf32>
    %cst_90 = arith.constant dense<0.000000e+00> : vector<32xf32>
    %231 = vector.multi_reduction <add>, %230, %cst_90 [1] : vector<32x16xf32> to vector<32xf32>
    %232 = vector.shape_cast %231 : vector<32xf32> to vector<32x1xf32>
    %233 = vector.shape_cast %216 : vector<32x16xbf16> to vector<2x16x16xbf16>
    %234 = vector.shape_cast %227 : vector<16x16xbf16> to vector<2x8x16xbf16>
    %235 = arith.truncf %205 : vector<16x16xf32> to vector<16x16xbf16>
    %236 = vector.shape_cast %235 : vector<16x16xbf16> to vector<2x8x16xbf16>
    %237 = vector.shape_cast %232 : vector<32x1xf32> to vector<2x16x1xf32>
    "tpu.trace_start"() <{level = 10 : i32, message = "bnd,bmd->bnm"}> : () -> ()
    %cst_91 = arith.constant dense<0.000000e+00> : vector<2x16x8xf32>
    %238 = tpu.matmul %233, %234, %cst_91 {dimension_numbers = #tpu.dot_dimension_numbers<[2], [2], [1], [1], [0, 0, 0, 1, 1, 1], [0], [0]>} : vector<2x16x16xbf16>, vector<2x8x16xbf16>, vector<2x16x8xf32> -> vector<2x16x8xf32>
    %cst_92 = arith.constant -3.40282347E+38 : f32
    "tpu.trace_stop"() : () -> ()
    %239 = vector.shape_cast %32 : vector<2x1x8xi1> to vector<2x1x8xi1>
    %240 = vector.broadcast %239 : vector<2x1x8xi1> to vector<2x16x8xi1>
    %241 = vector.broadcast %cst_92 : f32 to vector<2x16x8xf32>
    %242 = arith.select %240, %238, %241 : vector<2x16x8xi1>, vector<2x16x8xf32>
    %cst_93 = arith.constant dense<0xFF800000> : vector<2x16xf32>
    %243 = vector.multi_reduction <maximumf>, %242, %cst_93 [2] : vector<2x16x8xf32> to vector<2x16xf32>
    %244 = vector.shape_cast %243 : vector<2x16xf32> to vector<2x16x1xf32>
    %245 = arith.maximumf %244, %237 : vector<2x16x1xf32>
    %246 = vector.broadcast %245 : vector<2x16x1xf32> to vector<2x16x8xf32>
    %247 = arith.subf %242, %246 : vector<2x16x8xf32>
    %248 = math.exp %247 : vector<2x16x8xf32>
    %249 = arith.subf %237, %245 : vector<2x16x1xf32>
    %250 = math.exp %249 : vector<2x16x1xf32>
    %cst_94 = arith.constant dense<0.000000e+00> : vector<2x16xf32>
    %251 = vector.multi_reduction <add>, %248, %cst_94 [2] : vector<2x16x8xf32> to vector<2x16xf32>
    %252 = vector.shape_cast %251 : vector<2x16xf32> to vector<2x16x1xf32>
    %253 = arith.addf %252, %250 : vector<2x16x1xf32>
    %254 = tpu.reciprocal %253 {approx = true} : vector<2x16x1xf32> -> vector<2x16x1xf32>
    %255 = vector.broadcast %254 : vector<2x16x1xf32> to vector<2x16x8xf32>
    %256 = arith.mulf %248, %255 : vector<2x16x8xf32>
    %257 = arith.mulf %250, %254 : vector<2x16x1xf32>
    %258 = arith.truncf %256 : vector<2x16x8xf32> to vector<2x16x8xbf16>
    "tpu.trace_start"() <{level = 10 : i32, message = "bnm,bmd->bnd"}> : () -> ()
    %cst_95 = arith.constant dense<0.000000e+00> : vector<2x16x16xf32>
    %259 = tpu.matmul %258, %236, %cst_95 {dimension_numbers = #tpu.dot_dimension_numbers<[2], [1], [1], [2], [0, 0, 0, 1, 1, 2], [0], [0]>} : vector<2x16x8xbf16>, vector<2x8x16xbf16>, vector<2x16x16xf32> -> vector<2x16x16xf32>
    "tpu.trace_stop"() : () -> ()
    %260 = vector.shape_cast %47 : vector<1x16xf32> to vector<1x1x16xf32>
    %261 = vector.broadcast %257 : vector<2x16x1xf32> to vector<2x16x16xf32>
    %262 = vector.broadcast %260 : vector<1x1x16xf32> to vector<2x16x16xf32>
    %263 = arith.mulf %261, %262 : vector<2x16x16xf32>
    %264 = arith.addf %259, %263 : vector<2x16x16xf32>
    %265 = vector.shape_cast %264 : vector<2x16x16xf32> to vector<32x16xf32>
    %266 = arith.truncf %265 : vector<32x16xf32> to vector<32x16xbf16>
    %c2_96 = arith.constant 2 : index
    %c0_97 = arith.constant 0 : index
    %c0_98 = arith.constant 0 : index
    %267 = vector.load %arg7[%c2_96, %c0_97, %c0_98] : memref<4x16x32xbf16, #tpu.memory_space<vmem>>, vector<1x16x32xbf16>
    %268 = vector.shape_cast %267 : vector<1x16x32xbf16> to vector<16x32xbf16>
    %cst_99 = arith.constant dense<0.000000e+00> : vector<32x32xf32>
    %269 = tpu.matmul %266, %268, %cst_99 {dimension_numbers = #tpu.dot_dimension_numbers<[1], [0], [0], [1], [0, 0, 1, 1], [], []>} : vector<32x16xbf16>, vector<16x32xbf16>, vector<32x32xf32> -> vector<32x32xf32>
    %270 = arith.addf %196, %269 : vector<32x32xf32>
    %c3 = arith.constant 3 : index
    %c0_100 = arith.constant 0 : index
    %c0_101 = arith.constant 0 : index
    %271 = vector.load %arg4[%c3, %c0_100, %c0_101] : memref<4x32x16xbf16, #tpu.memory_space<vmem>>, vector<1x32x16xbf16>
    %272 = vector.shape_cast %271 : vector<1x32x16xbf16> to vector<32x16xbf16>
    %cst_102 = arith.constant dense<0.000000e+00> : vector<32x16xf32>
    %273 = tpu.matmul %26, %272, %cst_102 {dimension_numbers = #tpu.dot_dimension_numbers<[1], [0], [0], [1], [0, 0, 1, 1], [], []>} : vector<32x32xbf16>, vector<32x16xbf16>, vector<32x16xf32> -> vector<32x16xf32>
    %c3_103 = arith.constant 3 : index
    %c0_104 = arith.constant 0 : index
    %c0_105 = arith.constant 0 : index
    %274 = vector.load %arg5[%c3_103, %c0_104, %c0_105] : memref<4x32x16xbf16, #tpu.memory_space<vmem>>, vector<1x32x16xbf16>
    %275 = vector.shape_cast %274 : vector<1x32x16xbf16> to vector<32x16xbf16>
    %cst_106 = arith.constant dense<0.000000e+00> : vector<16x16xf32>
    %276 = tpu.matmul %28, %275, %cst_106 {dimension_numbers = #tpu.dot_dimension_numbers<[1], [0], [0], [1], [0, 0, 1, 1], [], []>} : vector<16x32xbf16>, vector<32x16xbf16>, vector<16x16xf32> -> vector<16x16xf32>
    %c3_107 = arith.constant 3 : index
    %c0_108 = arith.constant 0 : index
    %c0_109 = arith.constant 0 : index
    %277 = vector.load %arg6[%c3_107, %c0_108, %c0_109] : memref<4x32x16xbf16, #tpu.memory_space<vmem>>, vector<1x32x16xbf16>
    %278 = vector.shape_cast %277 : vector<1x32x16xbf16> to vector<32x16xbf16>
    %cst_110 = arith.constant dense<0.000000e+00> : vector<16x16xf32>
    %279 = tpu.matmul %28, %278, %cst_110 {dimension_numbers = #tpu.dot_dimension_numbers<[1], [0], [0], [1], [0, 0, 1, 1], [], []>} : vector<16x32xbf16>, vector<32x16xbf16>, vector<16x16xf32> -> vector<16x16xf32>
    %280 = arith.mulf %273, %273 : vector<32x16xf32>
    %cst_111 = arith.constant dense<0.000000e+00> : vector<32xf32>
    %281 = vector.multi_reduction <add>, %280, %cst_111 [1] : vector<32x16xf32> to vector<32xf32>
    %282 = vector.shape_cast %281 : vector<32xf32> to vector<32x1xf32>
    %cst_112 = arith.constant 1.000000e-24 : f32
    %283 = vector.broadcast %cst_112 : f32 to vector<32x1xf32>
    %284 = arith.maximumf %282, %283 : vector<32x1xf32>
    %285 = math.rsqrt %284 : vector<32x1xf32>
    %286 = vector.broadcast %285 : vector<32x1xf32> to vector<32x16xf32>
    %287 = arith.mulf %273, %286 : vector<32x16xf32>
    %288 = vector.broadcast %33 : vector<1x16xf32> to vector<32x16xf32>
    %289 = arith.mulf %287, %288 : vector<32x16xf32>
    %290 = arith.truncf %289 : vector<32x16xf32> to vector<32x16xbf16>
    %291 = arith.mulf %276, %276 : vector<16x16xf32>
    %cst_113 = arith.constant dense<0.000000e+00> : vector<16xf32>
    %292 = vector.multi_reduction <add>, %291, %cst_113 [1] : vector<16x16xf32> to vector<16xf32>
    %293 = vector.shape_cast %292 : vector<16xf32> to vector<16x1xf32>
    %cst_114 = arith.constant 1.000000e-24 : f32
    %294 = vector.broadcast %cst_114 : f32 to vector<16x1xf32>
    %295 = arith.maximumf %293, %294 : vector<16x1xf32>
    %296 = math.rsqrt %295 : vector<16x1xf32>
    %297 = vector.broadcast %296 : vector<16x1xf32> to vector<16x16xf32>
    %298 = arith.mulf %276, %297 : vector<16x16xf32>
    %299 = vector.broadcast %34 : vector<1x16xf32> to vector<16x16xf32>
    %300 = arith.mulf %298, %299 : vector<16x16xf32>
    %301 = arith.truncf %300 : vector<16x16xf32> to vector<16x16xbf16>
    %302 = arith.extf %290 : vector<32x16xbf16> to vector<32x16xf32>
    %303 = vector.broadcast %46 : vector<1x16xf32> to vector<32x16xf32>
    %304 = arith.mulf %302, %303 : vector<32x16xf32>
    %cst_115 = arith.constant dense<0.000000e+00> : vector<32xf32>
    %305 = vector.multi_reduction <add>, %304, %cst_115 [1] : vector<32x16xf32> to vector<32xf32>
    %306 = vector.shape_cast %305 : vector<32xf32> to vector<32x1xf32>
    %307 = vector.shape_cast %290 : vector<32x16xbf16> to vector<2x16x16xbf16>
    %308 = vector.shape_cast %301 : vector<16x16xbf16> to vector<2x8x16xbf16>
    %309 = arith.truncf %279 : vector<16x16xf32> to vector<16x16xbf16>
    %310 = vector.shape_cast %309 : vector<16x16xbf16> to vector<2x8x16xbf16>
    %311 = vector.shape_cast %306 : vector<32x1xf32> to vector<2x16x1xf32>
    "tpu.trace_start"() <{level = 10 : i32, message = "bnd,bmd->bnm"}> : () -> ()
    %cst_116 = arith.constant dense<0.000000e+00> : vector<2x16x8xf32>
    %312 = tpu.matmul %307, %308, %cst_116 {dimension_numbers = #tpu.dot_dimension_numbers<[2], [2], [1], [1], [0, 0, 0, 1, 1, 1], [0], [0]>} : vector<2x16x16xbf16>, vector<2x8x16xbf16>, vector<2x16x8xf32> -> vector<2x16x8xf32>
    %cst_117 = arith.constant -3.40282347E+38 : f32
    "tpu.trace_stop"() : () -> ()
    %313 = vector.shape_cast %32 : vector<2x1x8xi1> to vector<2x1x8xi1>
    %314 = vector.broadcast %313 : vector<2x1x8xi1> to vector<2x16x8xi1>
    %315 = vector.broadcast %cst_117 : f32 to vector<2x16x8xf32>
    %316 = arith.select %314, %312, %315 : vector<2x16x8xi1>, vector<2x16x8xf32>
    %cst_118 = arith.constant dense<0xFF800000> : vector<2x16xf32>
    %317 = vector.multi_reduction <maximumf>, %316, %cst_118 [2] : vector<2x16x8xf32> to vector<2x16xf32>
    %318 = vector.shape_cast %317 : vector<2x16xf32> to vector<2x16x1xf32>
    %319 = arith.maximumf %318, %311 : vector<2x16x1xf32>
    %320 = vector.broadcast %319 : vector<2x16x1xf32> to vector<2x16x8xf32>
    %321 = arith.subf %316, %320 : vector<2x16x8xf32>
    %322 = math.exp %321 : vector<2x16x8xf32>
    %323 = arith.subf %311, %319 : vector<2x16x1xf32>
    %324 = math.exp %323 : vector<2x16x1xf32>
    %cst_119 = arith.constant dense<0.000000e+00> : vector<2x16xf32>
    %325 = vector.multi_reduction <add>, %322, %cst_119 [2] : vector<2x16x8xf32> to vector<2x16xf32>
    %326 = vector.shape_cast %325 : vector<2x16xf32> to vector<2x16x1xf32>
    %327 = arith.addf %326, %324 : vector<2x16x1xf32>
    %328 = tpu.reciprocal %327 {approx = true} : vector<2x16x1xf32> -> vector<2x16x1xf32>
    %329 = vector.broadcast %328 : vector<2x16x1xf32> to vector<2x16x8xf32>
    %330 = arith.mulf %322, %329 : vector<2x16x8xf32>
    %331 = arith.mulf %324, %328 : vector<2x16x1xf32>
    %332 = arith.truncf %330 : vector<2x16x8xf32> to vector<2x16x8xbf16>
    "tpu.trace_start"() <{level = 10 : i32, message = "bnm,bmd->bnd"}> : () -> ()
    %cst_120 = arith.constant dense<0.000000e+00> : vector<2x16x16xf32>
    %333 = tpu.matmul %332, %310, %cst_120 {dimension_numbers = #tpu.dot_dimension_numbers<[2], [1], [1], [2], [0, 0, 0, 1, 1, 2], [0], [0]>} : vector<2x16x8xbf16>, vector<2x8x16xbf16>, vector<2x16x16xf32> -> vector<2x16x16xf32>
    "tpu.trace_stop"() : () -> ()
    %334 = vector.shape_cast %47 : vector<1x16xf32> to vector<1x1x16xf32>
    %335 = vector.broadcast %331 : vector<2x16x1xf32> to vector<2x16x16xf32>
    %336 = vector.broadcast %334 : vector<1x1x16xf32> to vector<2x16x16xf32>
    %337 = arith.mulf %335, %336 : vector<2x16x16xf32>
    %338 = arith.addf %333, %337 : vector<2x16x16xf32>
    %339 = vector.shape_cast %338 : vector<2x16x16xf32> to vector<32x16xf32>
    %340 = arith.truncf %339 : vector<32x16xf32> to vector<32x16xbf16>
    %c3_121 = arith.constant 3 : index
    %c0_122 = arith.constant 0 : index
    %c0_123 = arith.constant 0 : index
    %341 = vector.load %arg7[%c3_121, %c0_122, %c0_123] : memref<4x16x32xbf16, #tpu.memory_space<vmem>>, vector<1x16x32xbf16>
    %342 = vector.shape_cast %341 : vector<1x16x32xbf16> to vector<16x32xbf16>
    %cst_124 = arith.constant dense<0.000000e+00> : vector<32x32xf32>
    %343 = tpu.matmul %340, %342, %cst_124 {dimension_numbers = #tpu.dot_dimension_numbers<[1], [0], [0], [1], [0, 0, 1, 1], [], []>} : vector<32x16xbf16>, vector<16x32xbf16>, vector<32x32xf32> -> vector<32x32xf32>
    %344 = arith.addf %270, %343 : vector<32x32xf32>
    %c0_125 = arith.constant 0 : index
    %c0_126 = arith.constant 0 : index
    %345 = vector.load %arg13[%c0_125, %c0_126] : memref<1x32xf32, #tpu.memory_space<vmem>>, vector<1x32xf32>
    %cst_127 = arith.constant dense<0xFF800000> : vector<32xf32>
    %346 = vector.multi_reduction <maximumf>, %344, %cst_127 [1] : vector<32x32xf32> to vector<32xf32>
    %347 = vector.shape_cast %346 : vector<32xf32> to vector<32x1xf32>
    %348 = vector.broadcast %347 : vector<32x1xf32> to vector<32x32xf32>
    %349 = arith.divf %344, %348 : vector<32x32xf32>
    %cst_128 = arith.constant dense<0.000000e+00> : vector<32xf32>
    %350 = vector.multi_reduction <add>, %349, %cst_128 [1] : vector<32x32xf32> to vector<32xf32>
    %351 = vector.shape_cast %350 : vector<32xf32> to vector<32x1xf32>
    %cst_129 = arith.constant 3.200000e+01 : f32
    %352 = vector.broadcast %cst_129 : f32 to vector<32x1xf32>
    %353 = arith.divf %351, %352 : vector<32x1xf32>
    %354 = vector.broadcast %353 : vector<32x1xf32> to vector<32x32xf32>
    %355 = arith.subf %349, %354 : vector<32x32xf32>
    %356 = arith.mulf %355, %355 : vector<32x32xf32>
    %cst_130 = arith.constant dense<0.000000e+00> : vector<32xf32>
    %357 = vector.multi_reduction <add>, %356, %cst_130 [1] : vector<32x32xf32> to vector<32xf32>
    %358 = vector.shape_cast %357 : vector<32xf32> to vector<32x1xf32>
    %cst_131 = arith.constant 3.200000e+01 : f32
    %359 = vector.broadcast %cst_131 : f32 to vector<32x1xf32>
    %360 = arith.divf %358, %359 : vector<32x1xf32>
    %361 = vector.broadcast %353 : vector<32x1xf32> to vector<32x32xf32>
    %362 = arith.subf %349, %361 : vector<32x32xf32>
    %cst_132 = arith.constant 9.99999974E-6 : f32
    %363 = vector.broadcast %cst_132 : f32 to vector<32x1xf32>
    %364 = arith.addf %360, %363 : vector<32x1xf32>
    %365 = math.rsqrt %364 : vector<32x1xf32>
    %366 = vector.broadcast %365 : vector<32x1xf32> to vector<32x32xf32>
    %367 = arith.mulf %362, %366 : vector<32x32xf32>
    %368 = vector.broadcast %345 : vector<1x32xf32> to vector<32x32xf32>
    %369 = arith.mulf %367, %368 : vector<32x32xf32>
    %c0_133 = arith.constant 0 : index
    %c0_134 = arith.constant 0 : index
    %370 = vector.load %arg14[%c0_133, %c0_134] : memref<32x32xf32, #tpu.memory_space<vmem>>, vector<32x32xf32>
    tpu.vector_store %arg14[%c0_133, %c0_134], %369 {strides = array<i32>} : memref<32x32xf32, #tpu.memory_space<vmem>>, vector<32x32xf32>,
    return
  }
  func.func @transform_0(%arg0: i32) -> (i32, i32) {
    %c0_i32 = arith.constant 0 : i32
    %c0_i32_0 = arith.constant 0 : i32
    return %arg0, %c0_i32 : i32, i32
  }
  func.func @transform_1(%arg0: i32) -> (i32, i32) {
    %c0_i32 = arith.constant 0 : i32
    %c0_i32_0 = arith.constant 0 : i32
    return %arg0, %c0_i32 : i32, i32
  }
  func.func @transform_2(%arg0: i32) -> (i32, i32) {
    %c0_i32 = arith.constant 0 : i32
    %c0_i32_0 = arith.constant 0 : i32
    return %arg0, %c0_i32 : i32, i32
  }
  func.func @transform_3(%arg0: i32) -> (i32, i32, i32) {
    %c0_i32 = arith.constant 0 : i32
    %c0_i32_0 = arith.constant 0 : i32
    %c0_i32_1 = arith.constant 0 : i32
    %c0_i32_2 = arith.constant 0 : i32
    return %c0_i32, %c0_i32_0, %c0_i32_1 : i32, i32, i32
  }
  func.func @transform_4(%arg0: i32) -> (i32, i32, i32) {
    %c0_i32 = arith.constant 0 : i32
    %c0_i32_0 = arith.constant 0 : i32
    %c0_i32_1 = arith.constant 0 : i32
    %c0_i32_2 = arith.constant 0 : i32
    return %c0_i32, %c0_i32_0, %c0_i32_1 : i32, i32, i32
  }
  func.func @transform_5(%arg0: i32) -> (i32, i32, i32) {
    %c0_i32 = arith.constant 0 : i32
    %c0_i32_0 = arith.constant 0 : i32
    %c0_i32_1 = arith.constant 0 : i32
    %c0_i32_2 = arith.constant 0 : i32
    return %c0_i32, %c0_i32_0, %c0_i32_1 : i32, i32, i32
  }
  func.func @transform_6(%arg0: i32) -> (i32, i32, i32) {
    %c0_i32 = arith.constant 0 : i32
    %c0_i32_0 = arith.constant 0 : i32
    %c0_i32_1 = arith.constant 0 : i32
    %c0_i32_2 = arith.constant 0 : i32
    return %c0_i32, %c0_i32_0, %c0_i32_1 : i32, i32, i32
  }
  func.func @transform_7(%arg0: i32) -> (i32, i32) {
    %c0_i32 = arith.constant 0 : i32
    %c0_i32_0 = arith.constant 0 : i32
    %c0_i32_1 = arith.constant 0 : i32
    return %c0_i32, %c0_i32_0 : i32, i32
  }
  func.func @transform_8(%arg0: i32) -> (i32, i32) {
    %c0_i32 = arith.constant 0 : i32
    %c0_i32_0 = arith.constant 0 : i32
    %c0_i32_1 = arith.constant 0 : i32
    return %c0_i32, %c0_i32_0 : i32, i32
  }
  func.func @transform_9(%arg0: i32) -> (i32, i32) {
    %c0_i32 = arith.constant 0 : i32
    %c0_i32_0 = arith.constant 0 : i32
    %c0_i32_1 = arith.constant 0 : i32
    return %c0_i32, %c0_i32_0 : i32, i32
  }
  func.func @transform_10(%arg0: i32) -> (i32, i32) {
    %c0_i32 = arith.constant 0 : i32
    %c0_i32_0 = arith.constant 0 : i32
    %c0_i32_1 = arith.constant 0 : i32
    return %c0_i32, %c0_i32_0 : i32, i32
  }
  func.func @transform_11(%arg0: i32) -> (i32, i32) {
    %c0_i32 = arith.constant 0 : i32
    %c0_i32_0 = arith.constant 0 : i32
    %c0_i32_1 = arith.constant 0 : i32
    return %c0_i32, %c0_i32_0 : i32, i32
  }
  func.func @transform_12(%arg0: i32) -> (i32, i32) {
    %c0_i32 = arith.constant 0 : i32
    %c0_i32_0 = arith.constant 0 : i32
    %c0_i32_1 = arith.constant 0 : i32
    return %c0_i32, %c0_i32_0 : i32, i32
  }
  func.func @transform_13(%arg0: i32) -> (i32, i32) {
    %c0_i32 = arith.constant 0 : i32
    %c0_i32_0 = arith.constant 0 : i32
    return %arg0, %c0_i32 : i32, i32
  }
}

</mosaic_0001>

<llo_original>
// kernel: tpu_custom_call.1
$region0: #{tpu_custom_call.1}
  #allocation0 [shape = 'u32[]', space=smem, size = 0x4, offset = 0x4, fixed_abs, tag = 'smem constant byte address 0x4 - core index']
  #allocation1 [shape = 'u32[72,128]{1,0:T(1,128)}', space=vmem, size = 0x9000, scoped, tag = 'internal scratch']
  %s0 = inlined_call_operand.vmem [shape: f32[32,32], index: 0, kind: input, shape index: {}]
  %s1 = inlined_call_operand.vmem [shape: f32[16,32], index: 1, kind: input, shape index: {}]
  %s2 = inlined_call_operand.vmem [shape: f32[2,8], index: 2, kind: input, shape index: {}]
  %s3 = inlined_call_operand.vmem [shape: bf16[4,32,16], index: 3, kind: input, shape index: {}]
  %s4 = inlined_call_operand.vmem [shape: bf16[4,32,16], index: 4, kind: input, shape index: {}]
  %s5 = inlined_call_operand.vmem [shape: bf16[4,32,16], index: 5, kind: input, shape index: {}]
  %s6 = inlined_call_operand.vmem [shape: bf16[4,16,32], index: 6, kind: input, shape index: {}]
  %s7 = inlined_call_operand.vmem [shape: f32[1,16], index: 7, kind: input, shape index: {}]
  %s8 = inlined_call_operand.vmem [shape: f32[1,16], index: 8, kind: input, shape index: {}]
  %s9 = inlined_call_operand.vmem [shape: f32[1,16], index: 9, kind: input, shape index: {}]
  %s10 = inlined_call_operand.vmem [shape: f32[1,16], index: 10, kind: input, shape index: {}]
  %s11 = inlined_call_operand.vmem [shape: f32[1,32], index: 11, kind: input, shape index: {}]
  %s12 = inlined_call_operand.vmem [shape: f32[1,32], index: 12, kind: input, shape index: {}]
  %s13 = inlined_call_operand.hbm [shape: f32[32,32], index: 13, kind: output, shape index: {}]
  %s14 = sld [smem:[#allocation0]]
  $region62: #{tpu_custom_call.1} parent=0
    _
  %s16 = ssub.s32 1, %s14
  %s17 = scalar_select 0, %s16, %s14
  $region1: #{tpu_custom_call.1} parent=0
    #allocation2 [shape = 'u8[16384]{0}', space=vmem, size = 0x4000, scoped, tag = 'output window, operand 0, single buffered']
    #allocation3 [shape = 's32[1]{0}', space=sflag, size = 0x4, scoped, tag = 'scoped memory for tpu_custom_call.1']
    %18 = vsyncpa [#allocation3], 0
    // Predicated region
    $region2: #{tpu_custom_call.1} parent=1 // pred_check
      _
    $region3: #{tpu_custom_call.1} parent=1 // pred_check_branch
      %20 = sbr.rel (0) target = $region5
    $region4: #{tpu_custom_call.1} parent=1 // pred_region
      _
    $region5: #{tpu_custom_call.1} parent=1 // pred_fallthru
      _
    // Predicated region
    $region6: #{tpu_custom_call.1} parent=1 // pred_check
      _
    $region7: #{tpu_custom_call.1} parent=1 // pred_check_branch
      %22 = sbr.rel (0) target = $region9
    $region8: #{tpu_custom_call.1} parent=1 // pred_region
      _
    $region9: #{tpu_custom_call.1} parent=1 // pred_fallthru
      _
    // Predicated region
    $region10: #{tpu_custom_call.1} parent=1 // pred_check
      _
    $region11: #{tpu_custom_call.1} parent=1 // pred_check_branch
      %24 = sbr.rel (0) target = $region13
    $region12: #{tpu_custom_call.1} parent=1 // pred_region
      _
    $region13: #{tpu_custom_call.1} parent=1 // pred_fallthru
      _
    // Predicated region
    $region14: #{tpu_custom_call.1} parent=1 // pred_check
      _
    $region15: #{tpu_custom_call.1} parent=1 // pred_check_branch
      %26 = sbr.rel (0) target = $region17
    $region16: #{tpu_custom_call.1} parent=1 // pred_region
      _
    $region17: #{tpu_custom_call.1} parent=1 // pred_fallthru
      _
    // Predicated region
    $region18: #{tpu_custom_call.1} parent=1 // pred_check
      _
    $region19: #{tpu_custom_call.1} parent=1 // pred_check_branch
      %28 = sbr.rel (0) target = $region21
    $region20: #{tpu_custom_call.1} parent=1 // pred_region
      _
    $region21: #{tpu_custom_call.1} parent=1 // pred_fallthru
      _
    // Predicated region
    $region22: #{tpu_custom_call.1} parent=1 // pred_check
      _
    $region23: #{tpu_custom_call.1} parent=1 // pred_check_branch
      %30 = sbr.rel (0) target = $region25
    $region24: #{tpu_custom_call.1} parent=1 // pred_region
      _
    $region25: #{tpu_custom_call.1} parent=1 // pred_fallthru
      _
    // Predicated region
    $region26: #{tpu_custom_call.1} parent=1 // pred_check
      _
    $region27: #{tpu_custom_call.1} parent=1 // pred_check_branch
      %32 = sbr.rel (0) target = $region29
    $region28: #{tpu_custom_call.1} parent=1 // pred_region
      _
    $region29: #{tpu_custom_call.1} parent=1 // pred_fallthru
      _
    // Predicated region
    $region30: #{tpu_custom_call.1} parent=1 // pred_check
      _
    $region31: #{tpu_custom_call.1} parent=1 // pred_check_branch
      %34 = sbr.rel (0) target = $region33
    $region32: #{tpu_custom_call.1} parent=1 // pred_region
      _
    $region33: #{tpu_custom_call.1} parent=1 // pred_fallthru
      _
    // Predicated region
    $region34: #{tpu_custom_call.1} parent=1 // pred_check
      _
    $region35: #{tpu_custom_call.1} parent=1 // pred_check_branch
      %36 = sbr.rel (0) target = $region37
    $region36: #{tpu_custom_call.1} parent=1 // pred_region
      _
    $region37: #{tpu_custom_call.1} parent=1 // pred_fallthru
      _
    // Predicated region
    $region38: #{tpu_custom_call.1} parent=1 // pred_check
      _
    $region39: #{tpu_custom_call.1} parent=1 // pred_check_branch
      %38 = sbr.rel (0) target = $region41
    $region40: #{tpu_custom_call.1} parent=1 // pred_region
      _
    $region41: #{tpu_custom_call.1} parent=1 // pred_fallthru
      _
    // Predicated region
    $region42: #{tpu_custom_call.1} parent=1 // pred_check
      _
    $region43: #{tpu_custom_call.1} parent=1 // pred_check_branch
      %40 = sbr.rel (0) target = $region45
    $region44: #{tpu_custom_call.1} parent=1 // pred_region
      _
    $region45: #{tpu_custom_call.1} parent=1 // pred_fallthru
      _
    // Predicated region
    $region46: #{tpu_custom_call.1} parent=1 // pred_check
      _
    $region47: #{tpu_custom_call.1} parent=1 // pred_check_branch
      %42 = sbr.rel (0) target = $region49
    $region48: #{tpu_custom_call.1} parent=1 // pred_region
      _
    $region49: #{tpu_custom_call.1} parent=1 // pred_fallthru
      _
    // Predicated region
    $region50: #{tpu_custom_call.1} parent=1 // pred_check
      _
    $region51: #{tpu_custom_call.1} parent=1 // pred_check_branch
      %44 = sbr.rel (0) target = $region53
    $region52: #{tpu_custom_call.1} parent=1 // pred_region
      _
    $region53: #{tpu_custom_call.1} parent=1 // pred_fallthru
      _
    %v46 = vld [vmem:[%s0] sm:$0xff]
    %v47 = vld [vmem:[%s0 + $0x8] sm:$0xff]
    %v48 = vld [vmem:[%s0 + $0x10] sm:$0xff]
    %v49 = vld [vmem:[%s0 + $0x18] sm:$0xff]
    %v50 = vld [vmem:[%s11] sm:$0x1]
    %vm51 = vcmask 261120
    %v52 = vsel %vm51, %v46, -inf
    %53 = vmax.xlane.f32.xlu0 %v52
    %v54 = vpop.xlane.xlu0 %53
    %v55 = vsel %vm51, %v47, -inf
    %56 = vmax.xlane.f32.xlu0 %v55
    %v57 = vpop.xlane.xlu0 %56
    %v58 = vsel %vm51, %v48, -inf
    %59 = vmax.xlane.f32.xlu0 %v58
    %v60 = vpop.xlane.xlu0 %59
    %v61 = vsel %vm51, %v49, -inf
    %62 = vmax.xlane.f32.xlu0 %v61
    %v63 = vpop.xlane.xlu0 %62
    %v64 = vrcp.pop %v54
    %v65 = vmul.f32 %v54, %v64
    %v66 = vsub.f32 1.0, %v65
    %v67 = vmul.f32 %v64, %v66
    %v68 = vadd.f32 %v64, %v67
    %vm69 = vweird.f32 %v54
    %vm70 = vweird.f32 %v64
    %vm71 = vmor %vm69, %vm70
    %v72 = vsel %vm71, %v64, %v68
    %v73 = vand.u32 2147483647, %v54
    %vm74 = vcmp.eq.f32.partialorder %v73, 8.507059e+37
    %v75 = vand.u32 %v54, 2147483648
    %v76 = vor.u32 1.1754944e-38, %v75
    %v77 = vsel %vm74, %v76, %v72
    %v78 = vmul.f32 %v46, %v77
    %v79 = vrcp.pop %v57
    %v80 = vmul.f32 %v57, %v79
    %v81 = vsub.f32 1.0, %v80
    %v82 = vmul.f32 %v79, %v81
    %v83 = vadd.f32 %v79, %v82
    %vm84 = vweird.f32 %v57
    %vm85 = vweird.f32 %v79
    %vm86 = vmor %vm84, %vm85
    %v87 = vsel %vm86, %v79, %v83
    %v88 = vand.u32 2147483647, %v57
    %vm89 = vcmp.eq.f32.partialorder %v88, 8.507059e+37
    %v90 = vand.u32 %v57, 2147483648
    %v91 = vor.u32 1.1754944e-38, %v90
    %v92 = vsel %vm89, %v91, %v87
    %v93 = vmul.f32 %v47, %v92
    %v94 = vrcp.pop %v60
    %v95 = vmul.f32 %v60, %v94
    %v96 = vsub.f32 1.0, %v95
    %v97 = vmul.f32 %v94, %v96
    %v98 = vadd.f32 %v94, %v97
    %vm99 = vweird.f32 %v60
    %vm100 = vweird.f32 %v94
    %vm101 = vmor %vm99, %vm100
    %v102 = vsel %vm101, %v94, %v98
    %v103 = vand.u32 2147483647, %v60
    %vm104 = vcmp.eq.f32.partialorder %v103, 8.507059e+37
    %v105 = vand.u32 %v60, 2147483648
    %v106 = vor.u32 1.1754944e-38, %v105
    %v107 = vsel %vm104, %v106, %v102
    %v108 = vmul.f32 %v48, %v107
    %v109 = vrcp.pop %v63
    %v110 = vmul.f32 %v63, %v109
    %v111 = vsub.f32 1.0, %v110
    %v112 = vmul.f32 %v109, %v111
    %v113 = vadd.f32 %v109, %v112
    %vm114 = vweird.f32 %v63
    %vm115 = vweird.f32 %v109
    %vm116 = vmor %vm114, %vm115
    %v117 = vsel %vm116, %v109, %v113
    %v118 = vand.u32 2147483647, %v63
    %vm119 = vcmp.eq.f32.partialorder %v118, 8.507059e+37
    %v120 = vand.u32 %v63, 2147483648
    %v121 = vor.u32 1.1754944e-38, %v120
    %v122 = vsel %vm119, %v121, %v117
    %v123 = vmul.f32 %v49, %v122
    %v124 = vsel %vm51, %v78, 0.0
    %125 = vadd.xlane.f32.xlu0 %v124
    %v126 = vpop.xlane.xlu0 %125
    %v127 = vsel %vm51, %v93, 0.0
    %128 = vadd.xlane.f32.xlu0 %v127
    %v129 = vpop.xlane.xlu0 %128
    %v130 = vsel %vm51, %v108, 0.0
    %131 = vadd.xlane.f32.xlu0 %v130
    %v132 = vpop.xlane.xlu0 %131
    %v133 = vsel %vm51, %v123, 0.0
    %134 = vadd.xlane.f32.xlu0 %v133
    %v135 = vpop.xlane.xlu0 %134
    %v136 = vrcp.pop 32.0
    %v137 = vmul.f32 32.0, %v136
    %v138 = vsub.f32 1.0, %v137
    %v139 = vmul.f32 %v136, %v138
    %v140 = vadd.f32 %v136, %v139
    %vm141 = vweird.f32 %v136
    %v142 = vsel %vm141, %v136, %v140
    %v143 = vmul.f32 %v126, %v142
    %v144 = vmul.f32 %v129, %v142
    %v145 = vmul.f32 %v132, %v142
    %v146 = vmul.f32 %v135, %v142
    %v147 = vsub.f32 %v78, %v143
    %v148 = vsub.f32 %v93, %v144
    %v149 = vsub.f32 %v108, %v145
    %v150 = vsub.f32 %v123, %v146
    %v151 = vmul.f32 %v147, %v147
    %v152 = vmul.f32 %v148, %v148
    %v153 = vmul.f32 %v149, %v149
    %v154 = vmul.f32 %v150, %v150
    %v155 = vsel %vm51, %v151, 0.0
    %156 = vadd.xlane.f32.xlu0 %v155
    %v157 = vpop.xlane.xlu0 %156
    %v158 = vsel %vm51, %v152, 0.0
    %159 = vadd.xlane.f32.xlu0 %v158
    %v160 = vpop.xlane.xlu0 %159
    %v161 = vsel %vm51, %v153, 0.0
    %162 = vadd.xlane.f32.xlu0 %v161
    %v163 = vpop.xlane.xlu0 %162
    %v164 = vsel %vm51, %v154, 0.0
    %165 = vadd.xlane.f32.xlu0 %v164
    %v166 = vpop.xlane.xlu0 %165
    %v167 = vmul.f32 %v157, %v142
    %v168 = vmul.f32 %v160, %v142
    %v169 = vmul.f32 %v163, %v142
    %v170 = vmul.f32 %v166, %v142
    %v171 = vadd.f32 %v167, 1e-05
    %v172 = vadd.f32 %v168, 1e-05
    %v173 = vadd.f32 %v169, 1e-05
    %v174 = vadd.f32 %v170, 1e-05
    %v175 = vrsqrt.pop %v171
    %v176 = vmul.f32 %v175, %v171
    %v177 = vmul.f32 %v176, %v175
    %v178 = vmul.f32 0.5, %v177
    %v179 = vsub.f32 1.5, %v178
    %v180 = vmul.f32 %v175, %v179
    %vm181 = vweird.f32 %v171
    %vm182 = vweird.f32 %v175
    %vm183 = vmor %vm181, %vm182
    %v184 = vsel %vm183, %v175, %v180
    %v185 = vrsqrt.pop %v172
    %v186 = vmul.f32 %v185, %v172
    %v187 = vmul.f32 %v186, %v185
    %v188 = vmul.f32 0.5, %v187
    %v189 = vsub.f32 1.5, %v188
    %v190 = vmul.f32 %v185, %v189
    %vm191 = vweird.f32 %v172
    %vm192 = vweird.f32 %v185
    %vm193 = vmor %vm191, %vm192
    %v194 = vsel %vm193, %v185, %v190
    %v195 = vrsqrt.pop %v173
    %v196 = vmul.f32 %v195, %v173
    %v197 = vmul.f32 %v196, %v195
    %v198 = vmul.f32 0.5, %v197
    %v199 = vsub.f32 1.5, %v198
    %v200 = vmul.f32 %v195, %v199
    %vm201 = vweird.f32 %v173
    %vm202 = vweird.f32 %v195
    %vm203 = vmor %vm201, %vm202
    %v204 = vsel %vm203, %v195, %v200
    %v205 = vrsqrt.pop %v174
    %v206 = vmul.f32 %v205, %v174
    %v207 = vmul.f32 %v206, %v205
    %v208 = vmul.f32 0.5, %v207
    %v209 = vsub.f32 1.5, %v208
    %v210 = vmul.f32 %v205, %v209
    %vm211 = vweird.f32 %v174
    %vm212 = vweird.f32 %v205
    %vm213 = vmor %vm211, %vm212
    %v214 = vsel %vm213, %v205, %v210
    %v215 = vmul.f32 %v147, %v184
    %v216 = vmul.f32 %v148, %v194
    %v217 = vmul.f32 %v149, %v204
    %v218 = vmul.f32 %v150, %v214
    %v220 = vperm.slane %v50, 0
    %v222 = vmul.f32 %v215, %v220
    %v223 = vmul.f32 %v216, %v220
    %v224 = vmul.f32 %v217, %v220
    %v225 = vmul.f32 %v218, %v220
    %v226 = vpack.c.bf16 %v223, %v222
    %v227 = vpack.c.bf16 %v225, %v224
    %v228 = vld [vmem:[%s1] sm:$0xff]
    %v229 = vld [vmem:[%s1 + $0x8] sm:$0xff]
    %v230 = vpack.c.bf16 %v229, %v228
    %v231 = vld [vmem:[%s2] sm:$0x3]
    %vm232 = vcmp.gt.f32.partialorder %v231, 0.5
    %v233 = vsel %vm232, 1, 0
    %v234 = vrot.slane %v233, 1
    %vm235 = vcmp.ne.s32.totalorder %v234, 0
    %v236 = vld [vmem:[%s9] sm:$0x1]
    %v237 = vld [vmem:[%s10] sm:$0x1]
    %v238 = vld [vmem:[%s7] sm:$0x1]
    %v239 = vmul.f32 %v238, %v238
    %vm240 = vcmask 122880
    %v241 = vsel %vm240, %v239, 0.0
    %242 = vadd.xlane.f32.xlu0 %v241
    %v243 = vpop.xlane.xlu0 %242
    %v244 = vmax.f32 %v243, 1e-24
    %v245 = vrsqrt.pop %v244
    %v246 = vmul.f32 %v245, %v244
    %v247 = vmul.f32 %v246, %v245
    %v248 = vmul.f32 0.5, %v247
    %v249 = vsub.f32 1.5, %v248
    %v250 = vmul.f32 %v245, %v249
    %vm251 = vweird.f32 %v244
    %vm252 = vweird.f32 %v245
    %vm253 = vmor %vm251, %vm252
    %v254 = vsel %vm253, %v245, %v250
    %v255 = vmul.f32 %v238, %v254
    %v256 = vmul.f32 %v255, %v237
    %v257 = vpack.c.bf16 %v256, %v256
    %v258 = vunpack.c.l.bf16 %v257
    %v259 = vld [vmem:[%s8] sm:$0x1]
    %v260 = vld [vmem:[%s3] sm:$0xf]
    %v261 = vld [vmem:[%s3 + $0x4] sm:$0xf]
    %v262 = vld [vmem:[%s3 + $0x8] sm:$0xf]
    %v263 = vld [vmem:[%s3 + $0xc] sm:$0xf]
    %v268 = vunpack.c.l.b16 %v260
    %v269 = vunpack.c.l.b16 %v261
    %v270 = vunpack.c.l.b16 %v262
    %v271 = vunpack.c.l.b16 %v263
    %v272 = vpack.c.b16 %v269, %v268
    %v273 = vpack.c.b16 %v271, %v270
    %v277 = vsel %vm51, %v226, 0
    %v280 = vsel %vm51, %v227, 0
    %282 = vmatpush.bf16.msra.mxu0 0
    %283 = vmatpush.bf16.msra.mxu0 0
    %284 = vmatpush.bf16.msra.mxu0 0
    %285 = vmatpush.bf16.msra.mxu0 0
    %286 = vmatpush.bf16.msra.mxu0 0
    %287 = vmatpush.bf16.msra.mxu0 0
    %288 = vmatpush.bf16.msra.mxu0 %v273
    %289 = vmatpush.bf16.msra.mxu0 %v272
    %290 = vmatmul.bf16.gmra.mxu0 %v277
    %v291 = vpop.f32.mrf.mxu0
    %v292 = vadd.f32 0.0, %v291
    %v293 = vpop.f32.mrf.mxu0
    %v294 = vadd.f32 0.0, %v293
    %295 = vmatmul.bf16.gmra.mxu0 %v280
    %v296 = vpop.f32.mrf.mxu0
    %v297 = vadd.f32 0.0, %v296
    %v298 = vpop.f32.mrf.mxu0
    %v299 = vadd.f32 0.0, %v298
    %300 = vdwg.mxu0
    %v301 = vld [vmem:[%s4] sm:$0xf]
    %v302 = vld [vmem:[%s4 + $0x4] sm:$0xf]
    %v303 = vld [vmem:[%s4 + $0x8] sm:$0xf]
    %v304 = vld [vmem:[%s4 + $0xc] sm:$0xf]
    %v309 = vunpack.c.l.b16 %v301
    %v310 = vunpack.c.l.b16 %v302
    %v311 = vunpack.c.l.b16 %v303
    %v312 = vunpack.c.l.b16 %v304
    %v313 = vpack.c.b16 %v310, %v309
    %v314 = vpack.c.b16 %v312, %v311
    %v318 = vsel %vm51, %v230, 0
    %320 = vmatpush.bf16.msra.mxu0 0
    %321 = vmatpush.bf16.msra.mxu0 0
    %322 = vmatpush.bf16.msra.mxu0 0
    %323 = vmatpush.bf16.msra.mxu0 0
    %324 = vmatpush.bf16.msra.mxu0 0
    %325 = vmatpush.bf16.msra.mxu0 0
    %326 = vmatpush.bf16.msra.mxu0 %v314
    %327 = vmatpush.bf16.msra.mxu0 %v313
    %328 = vmatmul.bf16.gmra.mxu0 %v318
    %v329 = vpop.f32.mrf.mxu0
    %v330 = vadd.f32 0.0, %v329
    %v331 = vpop.f32.mrf.mxu0
    %v332 = vadd.f32 0.0, %v331
    %333 = vdwg.mxu0
    %v334 = vld [vmem:[%s5] sm:$0xf]
    %v335 = vld [vmem:[%s5 + $0x4] sm:$0xf]
    %v336 = vld [vmem:[%s5 + $0x8] sm:$0xf]
    %v337 = vld [vmem:[%s5 + $0xc] sm:$0xf]
    %v342 = vunpack.c.l.b16 %v334
    %v343 = vunpack.c.l.b16 %v335
    %v344 = vunpack.c.l.b16 %v336
    %v345 = vunpack.c.l.b16 %v337
    %v346 = vpack.c.b16 %v343, %v342
    %v347 = vpack.c.b16 %v345, %v344
    %350 = vmatpush.bf16.msra.mxu0 0
    %351 = vmatpush.bf16.msra.mxu0 0
    %352 = vmatpush.bf16.msra.mxu0 0
    %353 = vmatpush.bf16.msra.mxu0 0
    %354 = vmatpush.bf16.msra.mxu0 0
    %355 = vmatpush.bf16.msra.mxu0 0
    %356 = vmatpush.bf16.msra.mxu0 %v347
    %357 = vmatpush.bf16.msra.mxu0 %v346
    %358 = vmatmul.bf16.gmra.mxu0 %v318
    %v359 = vpop.f32.mrf.mxu0
    %v360 = vadd.f32 0.0, %v359
    %v361 = vpop.f32.mrf.mxu0
    %v362 = vadd.f32 0.0, %v361
    %363 = vdwg.mxu0
    %v364 = vmul.f32 %v292, %v292
    %v365 = vmul.f32 %v294, %v294
    %v366 = vmul.f32 %v297, %v297
    %v367 = vmul.f32 %v299, %v299
    %vm368 = vcmask 130048
    %v369 = vsel %vm368, %v364, 0.0
    %370 = vadd.xlane.f32.xlu0 %v369
    %v371 = vpop.xlane.xlu0 %370
    %v372 = vsel %vm368, %v365, 0.0
    %373 = vadd.xlane.f32.xlu0 %v372
    %v374 = vpop.xlane.xlu0 %373
    %v375 = vsel %vm368, %v366, 0.0
    %376 = vadd.xlane.f32.xlu0 %v375
    %v377 = vpop.xlane.xlu0 %376
    %v378 = vsel %vm368, %v367, 0.0
    %379 = vadd.xlane.f32.xlu0 %v378
    %v380 = vpop.xlane.xlu0 %379
    %v381 = vmax.f32 %v371, 1e-24
    %v382 = vmax.f32 %v374, 1e-24
    %v383 = vmax.f32 %v377, 1e-24
    %v384 = vmax.f32 %v380, 1e-24
    %v385 = vrsqrt.pop %v381
    %v386 = vmul.f32 %v385, %v381
    %v387 = vmul.f32 %v386, %v385
    %v388 = vmul.f32 0.5, %v387
    %v389 = vsub.f32 1.5, %v388
    %v390 = vmul.f32 %v385, %v389
    %vm391 = vweird.f32 %v381
    %vm392 = vweird.f32 %v385
    %vm393 = vmor %vm391, %vm392
    %v394 = vsel %vm393, %v385, %v390
    %v395 = vrsqrt.pop %v382
    %v396 = vmul.f32 %v395, %v382
    %v397 = vmul.f32 %v396, %v395
    %v398 = vmul.f32 0.5, %v397
    %v399 = vsub.f32 1.5, %v398
    %v400 = vmul.f32 %v395, %v399
    %vm401 = vweird.f32 %v382
    %vm402 = vweird.f32 %v395
    %vm403 = vmor %vm401, %vm402
    %v404 = vsel %vm403, %v395, %v400
    %v405 = vrsqrt.pop %v383
    %v406 = vmul.f32 %v405, %v383
    %v407 = vmul.f32 %v406, %v405
    %v408 = vmul.f32 0.5, %v407
    %v409 = vsub.f32 1.5, %v408
    %v410 = vmul.f32 %v405, %v409
    %vm411 = vweird.f32 %v383
    %vm412 = vweird.f32 %v405
    %vm413 = vmor %vm411, %vm412
    %v414 = vsel %vm413, %v405, %v410
    %v415 = vrsqrt.pop %v384
    %v416 = vmul.f32 %v415, %v384
    %v417 = vmul.f32 %v416, %v415
    %v418 = vmul.f32 0.5, %v417
    %v419 = vsub.f32 1.5, %v418
    %v420 = vmul.f32 %v415, %v419
    %vm421 = vweird.f32 %v384
    %vm422 = vweird.f32 %v415
    %vm423 = vmor %vm421, %vm422
    %v424 = vsel %vm423, %v415, %v420
    %v425 = vmul.f32 %v292, %v394
    %v426 = vmul.f32 %v294, %v404
    %v427 = vmul.f32 %v297, %v414
    %v428 = vmul.f32 %v299, %v424
    %v430 = vperm.slane %v236, 0
    %v432 = vmul.f32 %v425, %v430
    %v433 = vmul.f32 %v426, %v430
    %v434 = vmul.f32 %v427, %v430
    %v435 = vmul.f32 %v428, %v430
    %v436 = vpack.c.bf16 %v432, %v432
    %v437 = vpack.c.bf16 %v433, %v433
    %v438 = vpack.c.bf16 %v434, %v434
    %v439 = vpack.c.bf16 %v435, %v435
    %v440 = vmul.f32 %v330, %v330
    %v441 = vmul.f32 %v332, %v332
    %v442 = vsel %vm368, %v440, 0.0
    %443 = vadd.xlane.f32.xlu0 %v442
    %v444 = vpop.xlane.xlu0 %443
    %v445 = vsel %vm368, %v441, 0.0
    %446 = vadd.xlane.f32.xlu0 %v445
    %v447 = vpop.xlane.xlu0 %446
    %v448 = vmax.f32 %v444, 1e-24
    %v449 = vmax.f32 %v447, 1e-24
    %v450 = vrsqrt.pop %v448
    %v451 = vmul.f32 %v450, %v448
    %v452 = vmul.f32 %v451, %v450
    %v453 = vmul.f32 0.5, %v452
    %v454 = vsub.f32 1.5, %v453
    %v455 = vmul.f32 %v450, %v454
    %vm456 = vweird.f32 %v448
    %vm457 = vweird.f32 %v450
    %vm458 = vmor %vm456, %vm457
    %v459 = vsel %vm458, %v450, %v455
    %v460 = vrsqrt.pop %v449
    %v461 = vmul.f32 %v460, %v449
    %v462 = vmul.f32 %v461, %v460
    %v463 = vmul.f32 0.5, %v462
    %v464 = vsub.f32 1.5, %v463
    %v465 = vmul.f32 %v460, %v464
    %vm466 = vweird.f32 %v449
    %vm467 = vweird.f32 %v460
    %vm468 = vmor %vm466, %vm467
    %v469 = vsel %vm468, %v460, %v465
    %v470 = vmul.f32 %v330, %v459
    %v471 = vmul.f32 %v332, %v469
    %v473 = vperm.slane %v237, 0
    %v475 = vmul.f32 %v470, %v473
    %v476 = vmul.f32 %v471, %v473
    %v477 = vpack.c.bf16 %v475, %v475
    %v478 = vpack.c.bf16 %v476, %v476
    %v479 = vunpack.c.l.bf16 %v436
    %v480 = vunpack.c.l.bf16 %v437
    %v481 = vunpack.c.l.bf16 %v438
    %v482 = vunpack.c.l.bf16 %v439
    %v483 = vperm.slane %v258, 0
    %v484 = vmul.f32 %v479, %v483
    %v485 = vmul.f32 %v480, %v483
    %v486 = vmul.f32 %v481, %v483
    %v487 = vmul.f32 %v482, %v483
    %v488 = vsel %vm368, %v484, 0.0
    %489 = vadd.xlane.f32.xlu0 %v488
    %v490 = vpop.xlane.xlu0 %489
    %v491 = vsel %vm368, %v485, 0.0
    %492 = vadd.xlane.f32.xlu0 %v491
    %v493 = vpop.xlane.xlu0 %492
    %v494 = vsel %vm368, %v486, 0.0
    %495 = vadd.xlane.f32.xlu0 %v494
    %v496 = vpop.xlane.xlu0 %495
    %v497 = vsel %vm368, %v487, 0.0
    %498 = vadd.xlane.f32.xlu0 %v497
    %v499 = vpop.xlane.xlu0 %498
    %v500 = vpack.c.bf16 %v360, %v360
    %v501 = vpack.c.bf16 %v362, %v362
    %v504 = vunpack.c.l.b16 %v436
    %v505 = vunpack.c.l.b16 %v437
    %v506 = vpack.c.b16 %v505, %v504
    %v508 = vsel %vm368, %v506, 0
    %v511 = vsel %vm368, %v477, 0
    %513 = vmatpush.bf16.xpose.msra.mxu0 0
    %514 = vmatpush.bf16.xpose.msra.mxu0 0
    %515 = vmatpush.bf16.xpose.msra.mxu0 0
    %516 = vmatpush.bf16.xpose.msra.mxu0 0
    %517 = vmatpush.bf16.xpose.msra.mxu0 0
    %518 = vmatpush.bf16.xpose.msra.mxu0 0
    %519 = vmatpush.bf16.xpose.msra.mxu0 0
    %520 = vmatpush.bf16.xpose.msra.mxu0 %v511
    %521 = vmatmul.bf16.gmra.mxu0 %v508
    %v522 = vpop.f32.mrf.mxu0
    %v523 = vadd.f32 0.0, %v522
    %v524 = vpop.f32.mrf.mxu0
    %v525 = vadd.f32 0.0, %v524
    %526 = vdwg.mxu0
    %v529 = vunpack.c.l.b16 %v438
    %v530 = vunpack.c.l.b16 %v439
    %v531 = vpack.c.b16 %v530, %v529
    %v533 = vsel %vm368, %v531, 0
    %v536 = vsel %vm368, %v478, 0
    %538 = vmatpush.bf16.xpose.msra.mxu0 0
    %539 = vmatpush.bf16.xpose.msra.mxu0 0
    %540 = vmatpush.bf16.xpose.msra.mxu0 0
    %541 = vmatpush.bf16.xpose.msra.mxu0 0
    %542 = vmatpush.bf16.xpose.msra.mxu0 0
    %543 = vmatpush.bf16.xpose.msra.mxu0 0
    %544 = vmatpush.bf16.xpose.msra.mxu0 0
    %545 = vmatpush.bf16.xpose.msra.mxu0 %v536
    %546 = vmatmul.bf16.gmra.mxu0 %v533
    %v547 = vpop.f32.mrf.mxu0
    %v548 = vadd.f32 0.0, %v547
    %v549 = vpop.f32.mrf.mxu0
    %v550 = vadd.f32 0.0, %v549
    %551 = vdwg.mxu0
    %v552 = vsel %vm235, 1, 0
    %v553 = vperm.slane %v233, 0
    %v554 = vperm.slane %v552, 0
    %vm555 = vcmp.eq.s32.totalorder %v553, 1
    %vm556 = vcmp.eq.s32.totalorder %v554, 1
    %v557 = vsel %vm555, %v523, -3.4028235e+38
    %v558 = vsel %vm555, %v525, -3.4028235e+38
    %v559 = vsel %vm556, %v548, -3.4028235e+38
    %v560 = vsel %vm556, %v550, -3.4028235e+38
    %vm561 = vcmask 64512
    %v562 = vsel %vm561, %v557, -inf
    %563 = vmax.xlane.f32.xlu0 %v562
    %v564 = vpop.xlane.xlu0 %563
    %v565 = vsel %vm561, %v558, -inf
    %566 = vmax.xlane.f32.xlu0 %v565
    %v567 = vpop.xlane.xlu0 %566
    %v568 = vsel %vm561, %v559, -inf
    %569 = vmax.xlane.f32.xlu0 %v568
    %v570 = vpop.xlane.xlu0 %569
    %v571 = vsel %vm561, %v560, -inf
    %572 = vmax.xlane.f32.xlu0 %v571
    %v573 = vpop.xlane.xlu0 %572
    %v574 = vmax.f32 %v564, %v490
    %v575 = vmax.f32 %v567, %v493
    %v576 = vmax.f32 %v570, %v496
    %v577 = vmax.f32 %v573, %v499
    %v578 = vsub.f32 %v557, %v574
    %v579 = vsub.f32 %v558, %v575
    %v580 = vsub.f32 %v559, %v576
    %v581 = vsub.f32 %v560, %v577
    %v582 = vmul.f32 %v578, 1.442695
    %v583 = vpow.pop %v582
    %v584 = vmul.f32 %v579, 1.442695
    %v585 = vpow.pop %v584
    %v586 = vmul.f32 %v580, 1.442695
    %v587 = vpow.pop %v586
    %v588 = vmul.f32 %v581, 1.442695
    %v589 = vpow.pop %v588
    %v590 = vsub.f32 %v490, %v574
    %v591 = vsub.f32 %v493, %v575
    %v592 = vsub.f32 %v496, %v576
    %v593 = vsub.f32 %v499, %v577
    %v594 = vmul.f32 %v590, 1.442695
    %v595 = vpow.pop %v594
    %v596 = vmul.f32 %v591, 1.442695
    %v597 = vpow.pop %v596
    %v598 = vmul.f32 %v592, 1.442695
    %v599 = vpow.pop %v598
    %v600 = vmul.f32 %v593, 1.442695
    %v601 = vpow.pop %v600
    %v602 = vsel %vm561, %v583, 0.0
    %603 = vadd.xlane.f32.xlu0 %v602
    %v604 = vpop.xlane.xlu0 %603
    %v605 = vsel %vm561, %v585, 0.0
    %606 = vadd.xlane.f32.xlu0 %v605
    %v607 = vpop.xlane.xlu0 %606
    %v608 = vsel %vm561, %v587, 0.0
    %609 = vadd.xlane.f32.xlu0 %v608
    %v610 = vpop.xlane.xlu0 %609
    %v611 = vsel %vm561, %v589, 0.0
    %612 = vadd.xlane.f32.xlu0 %v611
    %v613 = vpop.xlane.xlu0 %612
    %v614 = vadd.f32 %v604, %v595
    %v615 = vadd.f32 %v607, %v597
    %v616 = vadd.f32 %v610, %v599
    %v617 = vadd.f32 %v613, %v601
    %v618 = vrcp.pop %v614
    %v619 = vrcp.pop %v615
    %v620 = vrcp.pop %v616
    %v621 = vrcp.pop %v617
    %v622 = vmul.f32 %v583, %v618
    %v623 = vmul.f32 %v585, %v619
    %v624 = vmul.f32 %v587, %v620
    %v625 = vmul.f32 %v589, %v621
    %v626 = vmul.f32 %v595, %v618
    %v627 = vmul.f32 %v597, %v619
    %v628 = vmul.f32 %v599, %v620
    %v629 = vmul.f32 %v601, %v621
    %v630 = vpack.c.bf16 %v622, %v622
    %v631 = vpack.c.bf16 %v623, %v623
    %v632 = vpack.c.bf16 %v624, %v624
    %v633 = vpack.c.bf16 %v625, %v625
    %v635 = vperm.slane %v259, 0
    %v637 = vmul.f32 %v626, %v635
    %v638 = vmul.f32 %v627, %v635
    %v639 = vmul.f32 %v628, %v635
    %v640 = vmul.f32 %v629, %v635
    %v643 = vunpack.c.l.b16 %v630
    %v644 = vunpack.c.l.b16 %v631
    %v645 = vpack.c.b16 %v644, %v643
    %v647 = vsel %vm561, %v645, 0
    %vm649 = vcmask 1043456
    %v651 = vsel %vm649, %v500, 0
    %653 = vmatpush.bf16.msra.mxu0 0
    %654 = vmatpush.bf16.msra.mxu0 0
    %655 = vmatpush.bf16.msra.mxu0 0
    %656 = vmatpush.bf16.msra.mxu0 0
    %657 = vmatpush.bf16.msra.mxu0 0
    %658 = vmatpush.bf16.msra.mxu0 0
    %659 = vmatpush.bf16.msra.mxu0 0
    %660 = vmatpush.bf16.msra.mxu0 %v651
    %661 = vmatmul.bf16.gmra.mxu0 %v647
    %v662 = vpop.f32.mrf.mxu0
    %v663 = vadd.f32 %v637, %v662
    %v664 = vpop.f32.mrf.mxu0
    %v665 = vadd.f32 %v638, %v664
    %666 = vdwg.mxu0
    %v669 = vunpack.c.l.b16 %v632
    %v670 = vunpack.c.l.b16 %v633
    %v671 = vpack.c.b16 %v670, %v669
    %v673 = vsel %vm561, %v671, 0
    %v676 = vsel %vm649, %v501, 0
    %678 = vmatpush.bf16.msra.mxu0 0
    %679 = vmatpush.bf16.msra.mxu0 0
    %680 = vmatpush.bf16.msra.mxu0 0
    %681 = vmatpush.bf16.msra.mxu0 0
    %682 = vmatpush.bf16.msra.mxu0 0
    %683 = vmatpush.bf16.msra.mxu0 0
    %684 = vmatpush.bf16.msra.mxu0 0
    %685 = vmatpush.bf16.msra.mxu0 %v676
    %686 = vmatmul.bf16.gmra.mxu0 %v673
    %v687 = vpop.f32.mrf.mxu0
    %v688 = vadd.f32 %v639, %v687
    %v689 = vpop.f32.mrf.mxu0
    %v690 = vadd.f32 %v640, %v689
    %691 = vdwg.mxu0
    %v692 = vpack.c.bf16 %v665, %v663
    %v693 = vpack.c.bf16 %v690, %v688
    %v694 = vld [vmem:[%s6] sm:$0xf]
    %v695 = vld [vmem:[%s6 + $0x4] sm:$0xf]
    %s696 = scalar_lea.vmem %s3, 16
    %v697 = vld [vmem:[%s696] sm:$0xf]
    %v698 = vld [vmem:[%s696 + $0x4] sm:$0xf]
    %v699 = vld [vmem:[%s696 + $0x8] sm:$0xf]
    %v700 = vld [vmem:[%s696 + $0xc] sm:$0xf]
    %v705 = vunpack.c.l.b16 %v697
    %v706 = vunpack.c.l.b16 %v698
    %v707 = vunpack.c.l.b16 %v699
    %v708 = vunpack.c.l.b16 %v700
    %v709 = vpack.c.b16 %v706, %v705
    %v710 = vpack.c.b16 %v708, %v707
    %713 = vmatpush.bf16.msra.mxu0 0
    %714 = vmatpush.bf16.msra.mxu0 0
    %715 = vmatpush.bf16.msra.mxu0 0
    %716 = vmatpush.bf16.msra.mxu0 0
    %717 = vmatpush.bf16.msra.mxu0 0
    %718 = vmatpush.bf16.msra.mxu0 0
    %719 = vmatpush.bf16.msra.mxu0 %v710
    %720 = vmatpush.bf16.msra.mxu0 %v709
    %721 = vmatmul.bf16.gmra.mxu0 %v277
    %v722 = vpop.f32.mrf.mxu0
    %v723 = vadd.f32 0.0, %v722
    %v724 = vpop.f32.mrf.mxu0
    %v725 = vadd.f32 0.0, %v724
    %726 = vmatmul.bf16.gmra.mxu0 %v280
    %v727 = vpop.f32.mrf.mxu0
    %v728 = vadd.f32 0.0, %v727
    %v729 = vpop.f32.mrf.mxu0
    %v730 = vadd.f32 0.0, %v729
    %731 = vdwg.mxu0
    %s732 = scalar_lea.vmem %s4, 16
    %v733 = vld [vmem:[%s732] sm:$0xf]
    %v734 = vld [vmem:[%s732 + $0x4] sm:$0xf]
    %v735 = vld [vmem:[%s732 + $0x8] sm:$0xf]
    %v736 = vld [vmem:[%s732 + $0xc] sm:$0xf]
    %v741 = vunpack.c.l.b16 %v733
    %v742 = vunpack.c.l.b16 %v734
    %v743 = vunpack.c.l.b16 %v735
    %v744 = vunpack.c.l.b16 %v736
    %v745 = vpack.c.b16 %v742, %v741
    %v746 = vpack.c.b16 %v744, %v743
    %749 = vmatpush.bf16.msra.mxu0 0
    %750 = vmatpush.bf16.msra.mxu0 0
    %751 = vmatpush.bf16.msra.mxu0 0
    %752 = vmatpush.bf16.msra.mxu0 0
    %753 = vmatpush.bf16.msra.mxu0 0
    %754 = vmatpush.bf16.msra.mxu0 0
    %755 = vmatpush.bf16.msra.mxu0 %v746
    %756 = vmatpush.bf16.msra.mxu0 %v745
    %757 = vmatmul.bf16.gmra.mxu0 %v318
    %v758 = vpop.f32.mrf.mxu0
    %v759 = vadd.f32 0.0, %v758
    %v760 = vpop.f32.mrf.mxu0
    %v761 = vadd.f32 0.0, %v760
    %762 = vdwg.mxu0
    %s763 = scalar_lea.vmem %s5, 16
    %v764 = vld [vmem:[%s763] sm:$0xf]
    %v765 = vld [vmem:[%s763 + $0x4] sm:$0xf]
    %v766 = vld [vmem:[%s763 + $0x8] sm:$0xf]
    %v767 = vld [vmem:[%s763 + $0xc] sm:$0xf]
    %v772 = vunpack.c.l.b16 %v764
    %v773 = vunpack.c.l.b16 %v765
    %v774 = vunpack.c.l.b16 %v766
    %v775 = vunpack.c.l.b16 %v767
    %v776 = vpack.c.b16 %v773, %v772
    %v777 = vpack.c.b16 %v775, %v774
    %780 = vmatpush.bf16.msra.mxu0 0
    %781 = vmatpush.bf16.msra.mxu0 0
    %782 = vmatpush.bf16.msra.mxu0 0
    %783 = vmatpush.bf16.msra.mxu0 0
    %784 = vmatpush.bf16.msra.mxu0 0
    %785 = vmatpush.bf16.msra.mxu0 0
    %786 = vmatpush.bf16.msra.mxu0 %v777
    %787 = vmatpush.bf16.msra.mxu0 %v776
    %788 = vmatmul.bf16.gmra.mxu0 %v318
    %v789 = vpop.f32.mrf.mxu0
    %v790 = vadd.f32 0.0, %v789
    %v791 = vpop.f32.mrf.mxu0
    %v792 = vadd.f32 0.0, %v791
    %793 = vdwg.mxu0
    %v794 = vmul.f32 %v723, %v723
    %v795 = vmul.f32 %v725, %v725
    %v796 = vmul.f32 %v728, %v728
    %v797 = vmul.f32 %v730, %v730
    %v798 = vsel %vm368, %v794, 0.0
    %799 = vadd.xlane.f32.xlu0 %v798
    %v800 = vpop.xlane.xlu0 %799
    %v801 = vsel %vm368, %v795, 0.0
    %802 = vadd.xlane.f32.xlu0 %v801
    %v803 = vpop.xlane.xlu0 %802
    %v804 = vsel %vm368, %v796, 0.0
    %805 = vadd.xlane.f32.xlu0 %v804
    %v806 = vpop.xlane.xlu0 %805
    %v807 = vsel %vm368, %v797, 0.0
    %808 = vadd.xlane.f32.xlu0 %v807
    %v809 = vpop.xlane.xlu0 %808
    %v810 = vmax.f32 %v800, 1e-24
    %v811 = vmax.f32 %v803, 1e-24
    %v812 = vmax.f32 %v806, 1e-24
    %v813 = vmax.f32 %v809, 1e-24
    %v814 = vrsqrt.pop %v810
    %v815 = vmul.f32 %v814, %v810
    %v816 = vmul.f32 %v815, %v814
    %v817 = vmul.f32 0.5, %v816
    %v818 = vsub.f32 1.5, %v817
    %v819 = vmul.f32 %v814, %v818
    %vm820 = vweird.f32 %v810
    %vm821 = vweird.f32 %v814
    %vm822 = vmor %vm820, %vm821
    %v823 = vsel %vm822, %v814, %v819
    %v824 = vrsqrt.pop %v811
    %v825 = vmul.f32 %v824, %v811
    %v826 = vmul.f32 %v825, %v824
    %v827 = vmul.f32 0.5, %v826
    %v828 = vsub.f32 1.5, %v827
    %v829 = vmul.f32 %v824, %v828
    %vm830 = vweird.f32 %v811
    %vm831 = vweird.f32 %v824
    %vm832 = vmor %vm830, %vm831
    %v833 = vsel %vm832, %v824, %v829
    %v834 = vrsqrt.pop %v812
    %v835 = vmul.f32 %v834, %v812
    %v836 = vmul.f32 %v835, %v834
    %v837 = vmul.f32 0.5, %v836
    %v838 = vsub.f32 1.5, %v837
    %v839 = vmul.f32 %v834, %v838
    %vm840 = vweird.f32 %v812
    %vm841 = vweird.f32 %v834
    %vm842 = vmor %vm840, %vm841
    %v843 = vsel %vm842, %v834, %v839
    %v844 = vrsqrt.pop %v813
    %v845 = vmul.f32 %v844, %v813
    %v846 = vmul.f32 %v845, %v844
    %v847 = vmul.f32 0.5, %v846
    %v848 = vsub.f32 1.5, %v847
    %v849 = vmul.f32 %v844, %v848
    %vm850 = vweird.f32 %v813
    %vm851 = vweird.f32 %v844
    %vm852 = vmor %vm850, %vm851
    %v853 = vsel %vm852, %v844, %v849
    %v854 = vmul.f32 %v723, %v823
    %v855 = vmul.f32 %v725, %v833
    %v856 = vmul.f32 %v728, %v843
    %v857 = vmul.f32 %v730, %v853
    %v858 = vmul.f32 %v854, %v430
    %v859 = vmul.f32 %v855, %v430
    %v860 = vmul.f32 %v856, %v430
    %v861 = vmul.f32 %v857, %v430
    %v862 = vpack.c.bf16 %v858, %v858
    %v863 = vpack.c.bf16 %v859, %v859
    %v864 = vpack.c.bf16 %v860, %v860
    %v865 = vpack.c.bf16 %v861, %v861
    %v866 = vmul.f32 %v759, %v759
    %v867 = vmul.f32 %v761, %v761
    %v868 = vsel %vm368, %v866, 0.0
    %869 = vadd.xlane.f32.xlu0 %v868
    %v870 = vpop.xlane.xlu0 %869
    %v871 = vsel %vm368, %v867, 0.0
    %872 = vadd.xlane.f32.xlu0 %v871
    %v873 = vpop.xlane.xlu0 %872
    %v874 = vmax.f32 %v870, 1e-24
    %v875 = vmax.f32 %v873, 1e-24
    %v876 = vrsqrt.pop %v874
    %v877 = vmul.f32 %v876, %v874
    %v878 = vmul.f32 %v877, %v876
    %v879 = vmul.f32 0.5, %v878
    %v880 = vsub.f32 1.5, %v879
    %v881 = vmul.f32 %v876, %v880
    %vm882 = vweird.f32 %v874
    %vm883 = vweird.f32 %v876
    %vm884 = vmor %vm882, %vm883
    %v885 = vsel %vm884, %v876, %v881
    %v886 = vrsqrt.pop %v875
    %v887 = vmul.f32 %v886, %v875
    %v888 = vmul.f32 %v887, %v886
    %v889 = vmul.f32 0.5, %v888
    %v890 = vsub.f32 1.5, %v889
    %v891 = vmul.f32 %v886, %v890
    %vm892 = vweird.f32 %v875
    %vm893 = vweird.f32 %v886
    %vm894 = vmor %vm892, %vm893
    %v895 = vsel %vm894, %v886, %v891
    %v896 = vmul.f32 %v759, %v885
    %v897 = vmul.f32 %v761, %v895
    %v898 = vmul.f32 %v896, %v473
    %v899 = vmul.f32 %v897, %v473
    %v900 = vpack.c.bf16 %v898, %v898
    %v901 = vpack.c.bf16 %v899, %v899
    %v902 = vunpack.c.l.bf16 %v862
    %v903 = vunpack.c.l.bf16 %v863
    %v904 = vunpack.c.l.bf16 %v864
    %v905 = vunpack.c.l.bf16 %v865
    %v906 = vmul.f32 %v902, %v483
    %v907 = vmul.f32 %v903, %v483
    %v908 = vmul.f32 %v904, %v483
    %v909 = vmul.f32 %v905, %v483
    %v910 = vsel %vm368, %v906, 0.0
    %911 = vadd.xlane.f32.xlu0 %v910
    %v912 = vpop.xlane.xlu0 %911
    %v913 = vsel %vm368, %v907, 0.0
    %914 = vadd.xlane.f32.xlu0 %v913
    %v915 = vpop.xlane.xlu0 %914
    %v916 = vsel %vm368, %v908, 0.0
    %917 = vadd.xlane.f32.xlu0 %v916
    %v918 = vpop.xlane.xlu0 %917
    %v919 = vsel %vm368, %v909, 0.0
    %920 = vadd.xlane.f32.xlu0 %v919
    %v921 = vpop.xlane.xlu0 %920
    %v922 = vpack.c.bf16 %v790, %v790
    %v923 = vpack.c.bf16 %v792, %v792
    %v926 = vunpack.c.l.b16 %v862
    %v927 = vunpack.c.l.b16 %v863
    %v928 = vpack.c.b16 %v927, %v926
    %v930 = vsel %vm368, %v928, 0
    %v933 = vsel %vm368, %v900, 0
    %935 = vmatpush.bf16.xpose.msra.mxu0 0
    %936 = vmatpush.bf16.xpose.msra.mxu0 0
    %937 = vmatpush.bf16.xpose.msra.mxu0 0
    %938 = vmatpush.bf16.xpose.msra.mxu0 0
    %939 = vmatpush.bf16.xpose.msra.mxu0 0
    %940 = vmatpush.bf16.xpose.msra.mxu0 0
    %941 = vmatpush.bf16.xpose.msra.mxu0 0
    %942 = vmatpush.bf16.xpose.msra.mxu0 %v933
    %943 = vmatmul.bf16.gmra.mxu0 %v930
    %v944 = vpop.f32.mrf.mxu0
    %v945 = vadd.f32 0.0, %v944
    %v946 = vpop.f32.mrf.mxu0
    %v947 = vadd.f32 0.0, %v946
    %948 = vdwg.mxu0
    %v951 = vunpack.c.l.b16 %v864
    %v952 = vunpack.c.l.b16 %v865
    %v953 = vpack.c.b16 %v952, %v951
    %v955 = vsel %vm368, %v953, 0
    %v958 = vsel %vm368, %v901, 0
    %960 = vmatpush.bf16.xpose.msra.mxu0 0
    %961 = vmatpush.bf16.xpose.msra.mxu0 0
    %962 = vmatpush.bf16.xpose.msra.mxu0 0
    %963 = vmatpush.bf16.xpose.msra.mxu0 0
    %964 = vmatpush.bf16.xpose.msra.mxu0 0
    %965 = vmatpush.bf16.xpose.msra.mxu0 0
    %966 = vmatpush.bf16.xpose.msra.mxu0 0
    %967 = vmatpush.bf16.xpose.msra.mxu0 %v958
    %968 = vmatmul.bf16.gmra.mxu0 %v955
    %v969 = vpop.f32.mrf.mxu0
    %v970 = vadd.f32 0.0, %v969
    %v971 = vpop.f32.mrf.mxu0
    %v972 = vadd.f32 0.0, %v971
    %973 = vdwg.mxu0
    %v974 = vsel %vm555, %v945, -3.4028235e+38
    %v975 = vsel %vm555, %v947, -3.4028235e+38
    %v976 = vsel %vm556, %v970, -3.4028235e+38
    %v977 = vsel %vm556, %v972, -3.4028235e+38
    %v978 = vsel %vm561, %v974, -inf
    %979 = vmax.xlane.f32.xlu0 %v978
    %v980 = vpop.xlane.xlu0 %979
    %v981 = vsel %vm561, %v975, -inf
    %982 = vmax.xlane.f32.xlu0 %v981
    %v983 = vpop.xlane.xlu0 %982
    %v984 = vsel %vm561, %v976, -inf
    %985 = vmax.xlane.f32.xlu0 %v984
    %v986 = vpop.xlane.xlu0 %985
    %v987 = vsel %vm561, %v977, -inf
    %988 = vmax.xlane.f32.xlu0 %v987
    %v989 = vpop.xlane.xlu0 %988
    %v990 = vmax.f32 %v980, %v912
    %v991 = vmax.f32 %v983, %v915
    %v992 = vmax.f32 %v986, %v918
    %v993 = vmax.f32 %v989, %v921
    %v994 = vsub.f32 %v974, %v990
    %v995 = vsub.f32 %v975, %v991
    %v996 = vsub.f32 %v976, %v992
    %v997 = vsub.f32 %v977, %v993
    %v998 = vmul.f32 %v994, 1.442695
    %v999 = vpow.pop %v998
    %v1000 = vmul.f32 %v995, 1.442695
    %v1001 = vpow.pop %v1000
    %v1002 = vmul.f32 %v996, 1.442695
    %v1003 = vpow.pop %v1002
    %v1004 = vmul.f32 %v997, 1.442695
    %v1005 = vpow.pop %v1004
    %v1006 = vsub.f32 %v912, %v990
    %v1007 = vsub.f32 %v915, %v991
    %v1008 = vsub.f32 %v918, %v992
    %v1009 = vsub.f32 %v921, %v993
    %v1010 = vmul.f32 %v1006, 1.442695
    %v1011 = vpow.pop %v1010
    %v1012 = vmul.f32 %v1007, 1.442695
    %v1013 = vpow.pop %v1012
    %v1014 = vmul.f32 %v1008, 1.442695
    %v1015 = vpow.pop %v1014
    %v1016 = vmul.f32 %v1009, 1.442695
    %v1017 = vpow.pop %v1016
    %v1018 = vsel %vm561, %v999, 0.0
    %1019 = vadd.xlane.f32.xlu0 %v1018
    %v1020 = vpop.xlane.xlu0 %1019
    %v1021 = vsel %vm561, %v1001, 0.0
    %1022 = vadd.xlane.f32.xlu0 %v1021
    %v1023 = vpop.xlane.xlu0 %1022
    %v1024 = vsel %vm561, %v1003, 0.0
    %1025 = vadd.xlane.f32.xlu0 %v1024
    %v1026 = vpop.xlane.xlu0 %1025
    %v1027 = vsel %vm561, %v1005, 0.0
    %1028 = vadd.xlane.f32.xlu0 %v1027
    %v1029 = vpop.xlane.xlu0 %1028
    %v1030 = vadd.f32 %v1020, %v1011
    %v1031 = vadd.f32 %v1023, %v1013
    %v1032 = vadd.f32 %v1026, %v1015
    %v1033 = vadd.f32 %v1029, %v1017
    %v1034 = vrcp.pop %v1030
    %v1035 = vrcp.pop %v1031
    %v1036 = vrcp.pop %v1032
    %v1037 = vrcp.pop %v1033
    %v1038 = vmul.f32 %v999, %v1034
    %v1039 = vmul.f32 %v1001, %v1035
    %v1040 = vmul.f32 %v1003, %v1036
    %v1041 = vmul.f32 %v1005, %v1037
    %v1042 = vmul.f32 %v1011, %v1034
    %v1043 = vmul.f32 %v1013, %v1035
    %v1044 = vmul.f32 %v1015, %v1036
    %v1045 = vmul.f32 %v1017, %v1037
    %v1046 = vpack.c.bf16 %v1038, %v1038
    %v1047 = vpack.c.bf16 %v1039, %v1039
    %v1048 = vpack.c.bf16 %v1040, %v1040
    %v1049 = vpack.c.bf16 %v1041, %v1041
    %v1050 = vmul.f32 %v1042, %v635
    %v1051 = vmul.f32 %v1043, %v635
    %v1052 = vmul.f32 %v1044, %v635
    %v1053 = vmul.f32 %v1045, %v635
    %v1056 = vunpack.c.l.b16 %v1046
    %v1057 = vunpack.c.l.b16 %v1047
    %v1058 = vpack.c.b16 %v1057, %v1056
    %v1060 = vsel %vm561, %v1058, 0
    %v1063 = vsel %vm649, %v922, 0
    %1065 = vmatpush.bf16.msra.mxu0 0
    %1066 = vmatpush.bf16.msra.mxu0 0
    %1067 = vmatpush.bf16.msra.mxu0 0
    %1068 = vmatpush.bf16.msra.mxu0 0
    %1069 = vmatpush.bf16.msra.mxu0 0
    %1070 = vmatpush.bf16.msra.mxu0 0
    %1071 = vmatpush.bf16.msra.mxu0 0
    %1072 = vmatpush.bf16.msra.mxu0 %v1063
    %1073 = vmatmul.bf16.gmra.mxu0 %v1060
    %v1074 = vpop.f32.mrf.mxu0
    %v1075 = vadd.f32 %v1050, %v1074
    %v1076 = vpop.f32.mrf.mxu0
    %v1077 = vadd.f32 %v1051, %v1076
    %1078 = vdwg.mxu0
    %v1081 = vunpack.c.l.b16 %v1048
    %v1082 = vunpack.c.l.b16 %v1049
    %v1083 = vpack.c.b16 %v1082, %v1081
    %v1085 = vsel %vm561, %v1083, 0
    %v1088 = vsel %vm649, %v923, 0
    %1090 = vmatpush.bf16.msra.mxu0 0
    %1091 = vmatpush.bf16.msra.mxu0 0
    %1092 = vmatpush.bf16.msra.mxu0 0
    %1093 = vmatpush.bf16.msra.mxu0 0
    %1094 = vmatpush.bf16.msra.mxu0 0
    %1095 = vmatpush.bf16.msra.mxu0 0
    %1096 = vmatpush.bf16.msra.mxu0 0
    %1097 = vmatpush.bf16.msra.mxu0 %v1088
    %1098 = vmatmul.bf16.gmra.mxu0 %v1085
    %v1099 = vpop.f32.mrf.mxu0
    %v1100 = vadd.f32 %v1052, %v1099
    %v1101 = vpop.f32.mrf.mxu0
    %v1102 = vadd.f32 %v1053, %v1101
    %1103 = vdwg.mxu0
    %v1104 = vpack.c.bf16 %v1077, %v1075
    %v1105 = vpack.c.bf16 %v1102, %v1100
    %s1106 = scalar_lea.vmem %s6, 8
    %v1107 = vld [vmem:[%s1106] sm:$0xf]
    %v1108 = vld [vmem:[%s1106 + $0x4] sm:$0xf]
    %v1111 = vunpack.c.l.b16 %v1107
    %v1112 = vunpack.c.l.b16 %v1108
    %v1113 = vpack.c.b16 %v1112, %v1111
    %v1116 = vsel %vm368, %v1104, 0
    %v1119 = vsel %vm368, %v1105, 0
    %1121 = vmatpush.bf16.msra.mxu0 0
    %1122 = vmatpush.bf16.msra.mxu0 0
    %1123 = vmatpush.bf16.msra.mxu0 0
    %1124 = vmatpush.bf16.msra.mxu0 0
    %1125 = vmatpush.bf16.msra.mxu0 0
    %1126 = vmatpush.bf16.msra.mxu0 0
    %1127 = vmatpush.bf16.msra.mxu0 0
    %1128 = vmatpush.bf16.msra.mxu0 %v1113
    %1129 = vmatmul.bf16.gmra.mxu0 %v1116
    %v1130 = vpop.f32.mrf.mxu0
    %v1131 = vadd.f32 0.0, %v1130
    %v1132 = vpop.f32.mrf.mxu0
    %v1133 = vadd.f32 0.0, %v1132
    %1134 = vmatmul.bf16.gmra.mxu0 %v1119
    %v1135 = vpop.f32.mrf.mxu0
    %v1136 = vadd.f32 0.0, %v1135
    %v1137 = vpop.f32.mrf.mxu0
    %v1138 = vadd.f32 0.0, %v1137
    %1139 = vdwg.mxu0
    %v1142 = vunpack.c.l.b16 %v694
    %v1143 = vunpack.c.l.b16 %v695
    %v1144 = vpack.c.b16 %v1143, %v1142
    %v1147 = vsel %vm368, %v692, 0
    %v1150 = vsel %vm368, %v693, 0
    %1152 = vmatpush.bf16.msra.mxu0 0
    %1153 = vmatpush.bf16.msra.mxu0 0
    %1154 = vmatpush.bf16.msra.mxu0 0
    %1155 = vmatpush.bf16.msra.mxu0 0
    %1156 = vmatpush.bf16.msra.mxu0 0
    %1157 = vmatpush.bf16.msra.mxu0 0
    %1158 = vmatpush.bf16.msra.mxu0 0
    %1159 = vmatpush.bf16.msra.mxu0 %v1144
    %1160 = vmatmul.bf16.gmra.mxu0 %v1147
    %v1161 = vpop.f32.mrf.mxu0
    %v1162 = vadd.f32 %v1131, %v1161
    %v1163 = vpop.f32.mrf.mxu0
    %v1164 = vadd.f32 %v1133, %v1163
    %1165 = vmatmul.bf16.gmra.mxu0 %v1150
    %v1166 = vpop.f32.mrf.mxu0
    %v1167 = vadd.f32 %v1136, %v1166
    %v1168 = vpop.f32.mrf.mxu0
    %v1169 = vadd.f32 %v1138, %v1168
    %1170 = vdwg.mxu0
    %s1171 = scalar_lea.vmem %s3, 32
    %v1172 = vld [vmem:[%s1171] sm:$0xf]
    %v1173 = vld [vmem:[%s1171 + $0x4] sm:$0xf]
    %v1174 = vld [vmem:[%s1171 + $0x8] sm:$0xf]
    %v1175 = vld [vmem:[%s1171 + $0xc] sm:$0xf]
    %v1180 = vunpack.c.l.b16 %v1172
    %v1181 = vunpack.c.l.b16 %v1173
    %v1182 = vunpack.c.l.b16 %v1174
    %v1183 = vunpack.c.l.b16 %v1175
    %v1184 = vpack.c.b16 %v1181, %v1180
    %v1185 = vpack.c.b16 %v1183, %v1182
    %1188 = vmatpush.bf16.msra.mxu0 0
    %1189 = vmatpush.bf16.msra.mxu0 0
    %1190 = vmatpush.bf16.msra.mxu0 0
    %1191 = vmatpush.bf16.msra.mxu0 0
    %1192 = vmatpush.bf16.msra.mxu0 0
    %1193 = vmatpush.bf16.msra.mxu0 0
    %1194 = vmatpush.bf16.msra.mxu0 %v1185
    %1195 = vmatpush.bf16.msra.mxu0 %v1184
    %1196 = vmatmul.bf16.gmra.mxu0 %v277
    %v1197 = vpop.f32.mrf.mxu0
    %v1198 = vadd.f32 0.0, %v1197
    %v1199 = vpop.f32.mrf.mxu0
    %v1200 = vadd.f32 0.0, %v1199
    %1201 = vmatmul.bf16.gmra.mxu0 %v280
    %v1202 = vpop.f32.mrf.mxu0
    %v1203 = vadd.f32 0.0, %v1202
    %v1204 = vpop.f32.mrf.mxu0
    %v1205 = vadd.f32 0.0, %v1204
    %1206 = vdwg.mxu0
    %s1207 = scalar_lea.vmem %s4, 32
    %v1208 = vld [vmem:[%s1207] sm:$0xf]
    %v1209 = vld [vmem:[%s1207 + $0x4] sm:$0xf]
    %v1210 = vld [vmem:[%s1207 + $0x8] sm:$0xf]
    %v1211 = vld [vmem:[%s1207 + $0xc] sm:$0xf]
    %v1216 = vunpack.c.l.b16 %v1208
    %v1217 = vunpack.c.l.b16 %v1209
    %v1218 = vunpack.c.l.b16 %v1210
    %v1219 = vunpack.c.l.b16 %v1211
    %v1220 = vpack.c.b16 %v1217, %v1216
    %v1221 = vpack.c.b16 %v1219, %v1218
    %1224 = vmatpush.bf16.msra.mxu0 0
    %1225 = vmatpush.bf16.msra.mxu0 0
    %1226 = vmatpush.bf16.msra.mxu0 0
    %1227 = vmatpush.bf16.msra.mxu0 0
    %1228 = vmatpush.bf16.msra.mxu0 0
    %1229 = vmatpush.bf16.msra.mxu0 0
    %1230 = vmatpush.bf16.msra.mxu0 %v1221
    %1231 = vmatpush.bf16.msra.mxu0 %v1220
    %1232 = vmatmul.bf16.gmra.mxu0 %v318
    %v1233 = vpop.f32.mrf.mxu0
    %v1234 = vadd.f32 0.0, %v1233
    %v1235 = vpop.f32.mrf.mxu0
    %v1236 = vadd.f32 0.0, %v1235
    %1237 = vdwg.mxu0
    %s1238 = scalar_lea.vmem %s5, 32
    %v1239 = vld [vmem:[%s1238] sm:$0xf]
    %v1240 = vld [vmem:[%s1238 + $0x4] sm:$0xf]
    %v1241 = vld [vmem:[%s1238 + $0x8] sm:$0xf]
    %v1242 = vld [vmem:[%s1238 + $0xc] sm:$0xf]
    %v1247 = vunpack.c.l.b16 %v1239
    %v1248 = vunpack.c.l.b16 %v1240
    %v1249 = vunpack.c.l.b16 %v1241
    %v1250 = vunpack.c.l.b16 %v1242
    %v1251 = vpack.c.b16 %v1248, %v1247
    %v1252 = vpack.c.b16 %v1250, %v1249
    %1255 = vmatpush.bf16.msra.mxu0 0
    %1256 = vmatpush.bf16.msra.mxu0 0
    %1257 = vmatpush.bf16.msra.mxu0 0
    %1258 = vmatpush.bf16.msra.mxu0 0
    %1259 = vmatpush.bf16.msra.mxu0 0
    %1260 = vmatpush.bf16.msra.mxu0 0
    %1261 = vmatpush.bf16.msra.mxu0 %v1252
    %1262 = vmatpush.bf16.msra.mxu0 %v1251
    %1263 = vmatmul.bf16.gmra.mxu0 %v318
    %v1264 = vpop.f32.mrf.mxu0
    %v1265 = vadd.f32 0.0, %v1264
    %v1266 = vpop.f32.mrf.mxu0
    %v1267 = vadd.f32 0.0, %v1266
    %1268 = vdwg.mxu0
    %v1269 = vmul.f32 %v1198, %v1198
    %v1270 = vmul.f32 %v1200, %v1200
    %v1271 = vmul.f32 %v1203, %v1203
    %v1272 = vmul.f32 %v1205, %v1205
    %v1273 = vsel %vm368, %v1269, 0.0
    %1274 = vadd.xlane.f32.xlu0 %v1273
    %v1275 = vpop.xlane.xlu0 %1274
    %v1276 = vsel %vm368, %v1270, 0.0
    %1277 = vadd.xlane.f32.xlu0 %v1276
    %v1278 = vpop.xlane.xlu0 %1277
    %v1279 = vsel %vm368, %v1271, 0.0
    %1280 = vadd.xlane.f32.xlu0 %v1279
    %v1281 = vpop.xlane.xlu0 %1280
    %v1282 = vsel %vm368, %v1272, 0.0
    %1283 = vadd.xlane.f32.xlu0 %v1282
    %v1284 = vpop.xlane.xlu0 %1283
    %v1285 = vmax.f32 %v1275, 1e-24
    %v1286 = vmax.f32 %v1278, 1e-24
    %v1287 = vmax.f32 %v1281, 1e-24
    %v1288 = vmax.f32 %v1284, 1e-24
    %v1289 = vrsqrt.pop %v1285
    %v1290 = vmul.f32 %v1289, %v1285
    %v1291 = vmul.f32 %v1290, %v1289
    %v1292 = vmul.f32 0.5, %v1291
    %v1293 = vsub.f32 1.5, %v1292
    %v1294 = vmul.f32 %v1289, %v1293
    %vm1295 = vweird.f32 %v1285
    %vm1296 = vweird.f32 %v1289
    %vm1297 = vmor %vm1295, %vm1296
    %v1298 = vsel %vm1297, %v1289, %v1294
    %v1299 = vrsqrt.pop %v1286
    %v1300 = vmul.f32 %v1299, %v1286
    %v1301 = vmul.f32 %v1300, %v1299
    %v1302 = vmul.f32 0.5, %v1301
    %v1303 = vsub.f32 1.5, %v1302
    %v1304 = vmul.f32 %v1299, %v1303
    %vm1305 = vweird.f32 %v1286
    %vm1306 = vweird.f32 %v1299
    %vm1307 = vmor %vm1305, %vm1306
    %v1308 = vsel %vm1307, %v1299, %v1304
    %v1309 = vrsqrt.pop %v1287
    %v1310 = vmul.f32 %v1309, %v1287
    %v1311 = vmul.f32 %v1310, %v1309
    %v1312 = vmul.f32 0.5, %v1311
    %v1313 = vsub.f32 1.5, %v1312
    %v1314 = vmul.f32 %v1309, %v1313
    %vm1315 = vweird.f32 %v1287
    %vm1316 = vweird.f32 %v1309
    %vm1317 = vmor %vm1315, %vm1316
    %v1318 = vsel %vm1317, %v1309, %v1314
    %v1319 = vrsqrt.pop %v1288
    %v1320 = vmul.f32 %v1319, %v1288
    %v1321 = vmul.f32 %v1320, %v1319
    %v1322 = vmul.f32 0.5, %v1321
    %v1323 = vsub.f32 1.5, %v1322
    %v1324 = vmul.f32 %v1319, %v1323
    %vm1325 = vweird.f32 %v1288
    %vm1326 = vweird.f32 %v1319
    %vm1327 = vmor %vm1325, %vm1326
    %v1328 = vsel %vm1327, %v1319, %v1324
    %v1329 = vmul.f32 %v1198, %v1298
    %v1330 = vmul.f32 %v1200, %v1308
    %v1331 = vmul.f32 %v1203, %v1318
    %v1332 = vmul.f32 %v1205, %v1328
    %v1333 = vmul.f32 %v1329, %v430
    %v1334 = vmul.f32 %v1330, %v430
    %v1335 = vmul.f32 %v1331, %v430
    %v1336 = vmul.f32 %v1332, %v430
    %v1337 = vpack.c.bf16 %v1333, %v1333
    %v1338 = vpack.c.bf16 %v1334, %v1334
    %v1339 = vpack.c.bf16 %v1335, %v1335
    %v1340 = vpack.c.bf16 %v1336, %v1336
    %v1341 = vmul.f32 %v1234, %v1234
    %v1342 = vmul.f32 %v1236, %v1236
    %v1343 = vsel %vm368, %v1341, 0.0
    %1344 = vadd.xlane.f32.xlu0 %v1343
    %v1345 = vpop.xlane.xlu0 %1344
    %v1346 = vsel %vm368, %v1342, 0.0
    %1347 = vadd.xlane.f32.xlu0 %v1346
    %v1348 = vpop.xlane.xlu0 %1347
    %v1349 = vmax.f32 %v1345, 1e-24
    %v1350 = vmax.f32 %v1348, 1e-24
    %v1351 = vrsqrt.pop %v1349
    %v1352 = vmul.f32 %v1351, %v1349
    %v1353 = vmul.f32 %v1352, %v1351
    %v1354 = vmul.f32 0.5, %v1353
    %v1355 = vsub.f32 1.5, %v1354
    %v1356 = vmul.f32 %v1351, %v1355
    %vm1357 = vweird.f32 %v1349
    %vm1358 = vweird.f32 %v1351
    %vm1359 = vmor %vm1357, %vm1358
    %v1360 = vsel %vm1359, %v1351, %v1356
    %v1361 = vrsqrt.pop %v1350
    %v1362 = vmul.f32 %v1361, %v1350
    %v1363 = vmul.f32 %v1362, %v1361
    %v1364 = vmul.f32 0.5, %v1363
    %v1365 = vsub.f32 1.5, %v1364
    %v1366 = vmul.f32 %v1361, %v1365
    %vm1367 = vweird.f32 %v1350
    %vm1368 = vweird.f32 %v1361
    %vm1369 = vmor %vm1367, %vm1368
    %v1370 = vsel %vm1369, %v1361, %v1366
    %v1371 = vmul.f32 %v1234, %v1360
    %v1372 = vmul.f32 %v1236, %v1370
    %v1373 = vmul.f32 %v1371, %v473
    %v1374 = vmul.f32 %v1372, %v473
    %v1375 = vpack.c.bf16 %v1373, %v1373
    %v1376 = vpack.c.bf16 %v1374, %v1374
    %v1377 = vunpack.c.l.bf16 %v1337
    %v1378 = vunpack.c.l.bf16 %v1338
    %v1379 = vunpack.c.l.bf16 %v1339
    %v1380 = vunpack.c.l.bf16 %v1340
    %v1381 = vmul.f32 %v1377, %v483
    %v1382 = vmul.f32 %v1378, %v483
    %v1383 = vmul.f32 %v1379, %v483
    %v1384 = vmul.f32 %v1380, %v483
    %v1385 = vsel %vm368, %v1381, 0.0
    %1386 = vadd.xlane.f32.xlu0 %v1385
    %v1387 = vpop.xlane.xlu0 %1386
    %v1388 = vsel %vm368, %v1382, 0.0
    %1389 = vadd.xlane.f32.xlu0 %v1388
    %v1390 = vpop.xlane.xlu0 %1389
    %v1391 = vsel %vm368, %v1383, 0.0
    %1392 = vadd.xlane.f32.xlu0 %v1391
    %v1393 = vpop.xlane.xlu0 %1392
    %v1394 = vsel %vm368, %v1384, 0.0
    %1395 = vadd.xlane.f32.xlu0 %v1394
    %v1396 = vpop.xlane.xlu0 %1395
    %v1397 = vpack.c.bf16 %v1265, %v1265
    %v1398 = vpack.c.bf16 %v1267, %v1267
    %v1401 = vunpack.c.l.b16 %v1337
    %v1402 = vunpack.c.l.b16 %v1338
    %v1403 = vpack.c.b16 %v1402, %v1401
    %v1405 = vsel %vm368, %v1403, 0
    %v1408 = vsel %vm368, %v1375, 0
    %1410 = vmatpush.bf16.xpose.msra.mxu0 0
    %1411 = vmatpush.bf16.xpose.msra.mxu0 0
    %1412 = vmatpush.bf16.xpose.msra.mxu0 0
    %1413 = vmatpush.bf16.xpose.msra.mxu0 0
    %1414 = vmatpush.bf16.xpose.msra.mxu0 0
    %1415 = vmatpush.bf16.xpose.msra.mxu0 0
    %1416 = vmatpush.bf16.xpose.msra.mxu0 0
    %1417 = vmatpush.bf16.xpose.msra.mxu0 %v1408
    %1418 = vmatmul.bf16.gmra.mxu0 %v1405
    %v1419 = vpop.f32.mrf.mxu0
    %v1420 = vadd.f32 0.0, %v1419
    %v1421 = vpop.f32.mrf.mxu0
    %v1422 = vadd.f32 0.0, %v1421
    %1423 = vdwg.mxu0
    %v1426 = vunpack.c.l.b16 %v1339
    %v1427 = vunpack.c.l.b16 %v1340
    %v1428 = vpack.c.b16 %v1427, %v1426
    %v1430 = vsel %vm368, %v1428, 0
    %v1433 = vsel %vm368, %v1376, 0
    %1435 = vmatpush.bf16.xpose.msra.mxu0 0
    %1436 = vmatpush.bf16.xpose.msra.mxu0 0
    %1437 = vmatpush.bf16.xpose.msra.mxu0 0
    %1438 = vmatpush.bf16.xpose.msra.mxu0 0
    %1439 = vmatpush.bf16.xpose.msra.mxu0 0
    %1440 = vmatpush.bf16.xpose.msra.mxu0 0
    %1441 = vmatpush.bf16.xpose.msra.mxu0 0
    %1442 = vmatpush.bf16.xpose.msra.mxu0 %v1433
    %1443 = vmatmul.bf16.gmra.mxu0 %v1430
    %v1444 = vpop.f32.mrf.mxu0
    %v1445 = vadd.f32 0.0, %v1444
    %v1446 = vpop.f32.mrf.mxu0
    %v1447 = vadd.f32 0.0, %v1446
    %1448 = vdwg.mxu0
    %v1449 = vsel %vm555, %v1420, -3.4028235e+38
    %v1450 = vsel %vm555, %v1422, -3.4028235e+38
    %v1451 = vsel %vm556, %v1445, -3.4028235e+38
    %v1452 = vsel %vm556, %v1447, -3.4028235e+38
    %v1453 = vsel %vm561, %v1449, -inf
    %1454 = vmax.xlane.f32.xlu0 %v1453
    %v1455 = vpop.xlane.xlu0 %1454
    %v1456 = vsel %vm561, %v1450, -inf
    %1457 = vmax.xlane.f32.xlu0 %v1456
    %v1458 = vpop.xlane.xlu0 %1457
    %v1459 = vsel %vm561, %v1451, -inf
    %1460 = vmax.xlane.f32.xlu0 %v1459
    %v1461 = vpop.xlane.xlu0 %1460
    %v1462 = vsel %vm561, %v1452, -inf
    %1463 = vmax.xlane.f32.xlu0 %v1462
    %v1464 = vpop.xlane.xlu0 %1463
    %v1465 = vmax.f32 %v1455, %v1387
    %v1466 = vmax.f32 %v1458, %v1390
    %v1467 = vmax.f32 %v1461, %v1393
    %v1468 = vmax.f32 %v1464, %v1396
    %v1469 = vsub.f32 %v1449, %v1465
    %v1470 = vsub.f32 %v1450, %v1466
    %v1471 = vsub.f32 %v1451, %v1467
    %v1472 = vsub.f32 %v1452, %v1468
    %v1473 = vmul.f32 %v1469, 1.442695
    %v1474 = vpow.pop %v1473
    %v1475 = vmul.f32 %v1470, 1.442695
    %v1476 = vpow.pop %v1475
    %v1477 = vmul.f32 %v1471, 1.442695
    %v1478 = vpow.pop %v1477
    %v1479 = vmul.f32 %v1472, 1.442695
    %v1480 = vpow.pop %v1479
    %v1481 = vsub.f32 %v1387, %v1465
    %v1482 = vsub.f32 %v1390, %v1466
    %v1483 = vsub.f32 %v1393, %v1467
    %v1484 = vsub.f32 %v1396, %v1468
    %v1485 = vmul.f32 %v1481, 1.442695
    %v1486 = vpow.pop %v1485
    %v1487 = vmul.f32 %v1482, 1.442695
    %v1488 = vpow.pop %v1487
    %v1489 = vmul.f32 %v1483, 1.442695
    %v1490 = vpow.pop %v1489
    %v1491 = vmul.f32 %v1484, 1.442695
    %v1492 = vpow.pop %v1491
    %v1493 = vsel %vm561, %v1474, 0.0
    %1494 = vadd.xlane.f32.xlu0 %v1493
    %v1495 = vpop.xlane.xlu0 %1494
    %v1496 = vsel %vm561, %v1476, 0.0
    %1497 = vadd.xlane.f32.xlu0 %v1496
    %v1498 = vpop.xlane.xlu0 %1497
    %v1499 = vsel %vm561, %v1478, 0.0
    %1500 = vadd.xlane.f32.xlu0 %v1499
    %v1501 = vpop.xlane.xlu0 %1500
    %v1502 = vsel %vm561, %v1480, 0.0
    %1503 = vadd.xlane.f32.xlu0 %v1502
    %v1504 = vpop.xlane.xlu0 %1503
    %v1505 = vadd.f32 %v1495, %v1486
    %v1506 = vadd.f32 %v1498, %v1488
    %v1507 = vadd.f32 %v1501, %v1490
    %v1508 = vadd.f32 %v1504, %v1492
    %v1509 = vrcp.pop %v1505
    %v1510 = vrcp.pop %v1506
    %v1511 = vrcp.pop %v1507
    %v1512 = vrcp.pop %v1508
    %v1513 = vmul.f32 %v1474, %v1509
    %v1514 = vmul.f32 %v1476, %v1510
    %v1515 = vmul.f32 %v1478, %v1511
    %v1516 = vmul.f32 %v1480, %v1512
    %v1517 = vmul.f32 %v1486, %v1509
    %v1518 = vmul.f32 %v1488, %v1510
    %v1519 = vmul.f32 %v1490, %v1511
    %v1520 = vmul.f32 %v1492, %v1512
    %v1521 = vpack.c.bf16 %v1513, %v1513
    %v1522 = vpack.c.bf16 %v1514, %v1514
    %v1523 = vpack.c.bf16 %v1515, %v1515
    %v1524 = vpack.c.bf16 %v1516, %v1516
    %v1525 = vmul.f32 %v1517, %v635
    %v1526 = vmul.f32 %v1518, %v635
    %v1527 = vmul.f32 %v1519, %v635
    %v1528 = vmul.f32 %v1520, %v635
    %v1531 = vunpack.c.l.b16 %v1521
    %v1532 = vunpack.c.l.b16 %v1522
    %v1533 = vpack.c.b16 %v1532, %v1531
    %v1535 = vsel %vm561, %v1533, 0
    %v1538 = vsel %vm649, %v1397, 0
    %1540 = vmatpush.bf16.msra.mxu0 0
    %1541 = vmatpush.bf16.msra.mxu0 0
    %1542 = vmatpush.bf16.msra.mxu0 0
    %1543 = vmatpush.bf16.msra.mxu0 0
    %1544 = vmatpush.bf16.msra.mxu0 0
    %1545 = vmatpush.bf16.msra.mxu0 0
    %1546 = vmatpush.bf16.msra.mxu0 0
    %1547 = vmatpush.bf16.msra.mxu0 %v1538
    %1548 = vmatmul.bf16.gmra.mxu0 %v1535
    %v1549 = vpop.f32.mrf.mxu0
    %v1550 = vadd.f32 %v1525, %v1549
    %v1551 = vpop.f32.mrf.mxu0
    %v1552 = vadd.f32 %v1526, %v1551
    %1553 = vdwg.mxu0
    %v1556 = vunpack.c.l.b16 %v1523
    %v1557 = vunpack.c.l.b16 %v1524
    %v1558 = vpack.c.b16 %v1557, %v1556
    %v1560 = vsel %vm561, %v1558, 0
    %v1563 = vsel %vm649, %v1398, 0
    %1565 = vmatpush.bf16.msra.mxu0 0
    %1566 = vmatpush.bf16.msra.mxu0 0
    %1567 = vmatpush.bf16.msra.mxu0 0
    %1568 = vmatpush.bf16.msra.mxu0 0
    %1569 = vmatpush.bf16.msra.mxu0 0
    %1570 = vmatpush.bf16.msra.mxu0 0
    %1571 = vmatpush.bf16.msra.mxu0 0
    %1572 = vmatpush.bf16.msra.mxu0 %v1563
    %1573 = vmatmul.bf16.gmra.mxu0 %v1560
    %v1574 = vpop.f32.mrf.mxu0
    %v1575 = vadd.f32 %v1527, %v1574
    %v1576 = vpop.f32.mrf.mxu0
    %v1577 = vadd.f32 %v1528, %v1576
    %1578 = vdwg.mxu0
    %v1579 = vpack.c.bf16 %v1552, %v1550
    %v1580 = vpack.c.bf16 %v1577, %v1575
    %s1581 = scalar_lea.vmem %s6, 16
    %v1582 = vld [vmem:[%s1581] sm:$0xf]
    %v1583 = vld [vmem:[%s1581 + $0x4] sm:$0xf]
    %v1586 = vunpack.c.l.b16 %v1582
    %v1587 = vunpack.c.l.b16 %v1583
    %v1588 = vpack.c.b16 %v1587, %v1586
    %v1591 = vsel %vm368, %v1579, 0
    %v1594 = vsel %vm368, %v1580, 0
    %1596 = vmatpush.bf16.msra.mxu0 0
    %1597 = vmatpush.bf16.msra.mxu0 0
    %1598 = vmatpush.bf16.msra.mxu0 0
    %1599 = vmatpush.bf16.msra.mxu0 0
    %1600 = vmatpush.bf16.msra.mxu0 0
    %1601 = vmatpush.bf16.msra.mxu0 0
    %1602 = vmatpush.bf16.msra.mxu0 0
    %1603 = vmatpush.bf16.msra.mxu0 %v1588
    %1604 = vmatmul.bf16.gmra.mxu0 %v1591
    %v1605 = vpop.f32.mrf.mxu0
    %v1606 = vadd.f32 0.0, %v1605
    %v1607 = vpop.f32.mrf.mxu0
    %v1608 = vadd.f32 0.0, %v1607
    %1609 = vmatmul.bf16.gmra.mxu0 %v1594
    %v1610 = vpop.f32.mrf.mxu0
    %v1611 = vadd.f32 0.0, %v1610
    %v1612 = vpop.f32.mrf.mxu0
    %v1613 = vadd.f32 0.0, %v1612
    %1614 = vdwg.mxu0
    %v1615 = vadd.f32 %v1162, %v1606
    %v1616 = vadd.f32 %v1164, %v1608
    %v1617 = vadd.f32 %v1167, %v1611
    %v1618 = vadd.f32 %v1169, %v1613
    %s1619 = scalar_lea.vmem %s3, 48
    %v1620 = vld [vmem:[%s1619] sm:$0xf]
    %v1621 = vld [vmem:[%s1619 + $0x4] sm:$0xf]
    %v1622 = vld [vmem:[%s1619 + $0x8] sm:$0xf]
    %v1623 = vld [vmem:[%s1619 + $0xc] sm:$0xf]
    %v1628 = vunpack.c.l.b16 %v1620
    %v1629 = vunpack.c.l.b16 %v1621
    %v1630 = vunpack.c.l.b16 %v1622
    %v1631 = vunpack.c.l.b16 %v1623
    %v1632 = vpack.c.b16 %v1629, %v1628
    %v1633 = vpack.c.b16 %v1631, %v1630
    %1636 = vmatpush.bf16.msra.mxu0 0
    %1637 = vmatpush.bf16.msra.mxu0 0
    %1638 = vmatpush.bf16.msra.mxu0 0
    %1639 = vmatpush.bf16.msra.mxu0 0
    %1640 = vmatpush.bf16.msra.mxu0 0
    %1641 = vmatpush.bf16.msra.mxu0 0
    %1642 = vmatpush.bf16.msra.mxu0 %v1633
    %1643 = vmatpush.bf16.msra.mxu0 %v1632
    %1644 = vmatmul.bf16.gmra.mxu0 %v277
    %v1645 = vpop.f32.mrf.mxu0
    %v1646 = vadd.f32 0.0, %v1645
    %v1647 = vpop.f32.mrf.mxu0
    %v1648 = vadd.f32 0.0, %v1647
    %1649 = vmatmul.bf16.gmra.mxu0 %v280
    %v1650 = vpop.f32.mrf.mxu0
    %v1651 = vadd.f32 0.0, %v1650
    %v1652 = vpop.f32.mrf.mxu0
    %v1653 = vadd.f32 0.0, %v1652
    %1654 = vdwg.mxu0
    %s1655 = scalar_lea.vmem %s4, 48
    %v1656 = vld [vmem:[%s1655] sm:$0xf]
    %v1657 = vld [vmem:[%s1655 + $0x4] sm:$0xf]
    %v1658 = vld [vmem:[%s1655 + $0x8] sm:$0xf]
    %v1659 = vld [vmem:[%s1655 + $0xc] sm:$0xf]
    %v1664 = vunpack.c.l.b16 %v1656
    %v1665 = vunpack.c.l.b16 %v1657
    %v1666 = vunpack.c.l.b16 %v1658
    %v1667 = vunpack.c.l.b16 %v1659
    %v1668 = vpack.c.b16 %v1665, %v1664
    %v1669 = vpack.c.b16 %v1667, %v1666
    %1672 = vmatpush.bf16.msra.mxu0 0
    %1673 = vmatpush.bf16.msra.mxu0 0
    %1674 = vmatpush.bf16.msra.mxu0 0
    %1675 = vmatpush.bf16.msra.mxu0 0
    %1676 = vmatpush.bf16.msra.mxu0 0
    %1677 = vmatpush.bf16.msra.mxu0 0
    %1678 = vmatpush.bf16.msra.mxu0 %v1669
    %1679 = vmatpush.bf16.msra.mxu0 %v1668
    %1680 = vmatmul.bf16.gmra.mxu0 %v318
    %v1681 = vpop.f32.mrf.mxu0
    %v1682 = vadd.f32 0.0, %v1681
    %v1683 = vpop.f32.mrf.mxu0
    %v1684 = vadd.f32 0.0, %v1683
    %1685 = vdwg.mxu0
    %s1686 = scalar_lea.vmem %s5, 48
    %v1687 = vld [vmem:[%s1686] sm:$0xf]
    %v1688 = vld [vmem:[%s1686 + $0x4] sm:$0xf]
    %v1689 = vld [vmem:[%s1686 + $0x8] sm:$0xf]
    %v1690 = vld [vmem:[%s1686 + $0xc] sm:$0xf]
    %v1695 = vunpack.c.l.b16 %v1687
    %v1696 = vunpack.c.l.b16 %v1688
    %v1697 = vunpack.c.l.b16 %v1689
    %v1698 = vunpack.c.l.b16 %v1690
    %v1699 = vpack.c.b16 %v1696, %v1695
    %v1700 = vpack.c.b16 %v1698, %v1697
    %1703 = vmatpush.bf16.msra.mxu0 0
    %1704 = vmatpush.bf16.msra.mxu0 0
    %1705 = vmatpush.bf16.msra.mxu0 0
    %1706 = vmatpush.bf16.msra.mxu0 0
    %1707 = vmatpush.bf16.msra.mxu0 0
    %1708 = vmatpush.bf16.msra.mxu0 0
    %1709 = vmatpush.bf16.msra.mxu0 %v1700
    %1710 = vmatpush.bf16.msra.mxu0 %v1699
    %1711 = vmatmul.bf16.gmra.mxu0 %v318
    %v1712 = vpop.f32.mrf.mxu0
    %v1713 = vadd.f32 0.0, %v1712
    %v1714 = vpop.f32.mrf.mxu0
    %v1715 = vadd.f32 0.0, %v1714
    %1716 = vdwg.mxu0
    %v1717 = vmul.f32 %v1646, %v1646
    %v1718 = vmul.f32 %v1648, %v1648
    %v1719 = vmul.f32 %v1651, %v1651
    %v1720 = vmul.f32 %v1653, %v1653
    %v1721 = vsel %vm368, %v1717, 0.0
    %1722 = vadd.xlane.f32.xlu0 %v1721
    %v1723 = vpop.xlane.xlu0 %1722
    %v1724 = vsel %vm368, %v1718, 0.0
    %1725 = vadd.xlane.f32.xlu0 %v1724
    %v1726 = vpop.xlane.xlu0 %1725
    %v1727 = vsel %vm368, %v1719, 0.0
    %1728 = vadd.xlane.f32.xlu0 %v1727
    %v1729 = vpop.xlane.xlu0 %1728
    %v1730 = vsel %vm368, %v1720, 0.0
    %1731 = vadd.xlane.f32.xlu0 %v1730
    %v1732 = vpop.xlane.xlu0 %1731
    %v1733 = vmax.f32 %v1723, 1e-24
    %v1734 = vmax.f32 %v1726, 1e-24
    %v1735 = vmax.f32 %v1729, 1e-24
    %v1736 = vmax.f32 %v1732, 1e-24
    %v1737 = vrsqrt.pop %v1733
    %v1738 = vmul.f32 %v1737, %v1733
    %v1739 = vmul.f32 %v1738, %v1737
    %v1740 = vmul.f32 0.5, %v1739
    %v1741 = vsub.f32 1.5, %v1740
    %v1742 = vmul.f32 %v1737, %v1741
    %vm1743 = vweird.f32 %v1733
    %vm1744 = vweird.f32 %v1737
    %vm1745 = vmor %vm1743, %vm1744
    %v1746 = vsel %vm1745, %v1737, %v1742
    %v1747 = vrsqrt.pop %v1734
    %v1748 = vmul.f32 %v1747, %v1734
    %v1749 = vmul.f32 %v1748, %v1747
    %v1750 = vmul.f32 0.5, %v1749
    %v1751 = vsub.f32 1.5, %v1750
    %v1752 = vmul.f32 %v1747, %v1751
    %vm1753 = vweird.f32 %v1734
    %vm1754 = vweird.f32 %v1747
    %vm1755 = vmor %vm1753, %vm1754
    %v1756 = vsel %vm1755, %v1747, %v1752
    %v1757 = vrsqrt.pop %v1735
    %v1758 = vmul.f32 %v1757, %v1735
    %v1759 = vmul.f32 %v1758, %v1757
    %v1760 = vmul.f32 0.5, %v1759
    %v1761 = vsub.f32 1.5, %v1760
    %v1762 = vmul.f32 %v1757, %v1761
    %vm1763 = vweird.f32 %v1735
    %vm1764 = vweird.f32 %v1757
    %vm1765 = vmor %vm1763, %vm1764
    %v1766 = vsel %vm1765, %v1757, %v1762
    %v1767 = vrsqrt.pop %v1736
    %v1768 = vmul.f32 %v1767, %v1736
    %v1769 = vmul.f32 %v1768, %v1767
    %v1770 = vmul.f32 0.5, %v1769
    %v1771 = vsub.f32 1.5, %v1770
    %v1772 = vmul.f32 %v1767, %v1771
    %vm1773 = vweird.f32 %v1736
    %vm1774 = vweird.f32 %v1767
    %vm1775 = vmor %vm1773, %vm1774
    %v1776 = vsel %vm1775, %v1767, %v1772
    %v1777 = vmul.f32 %v1646, %v1746
    %v1778 = vmul.f32 %v1648, %v1756
    %v1779 = vmul.f32 %v1651, %v1766
    %v1780 = vmul.f32 %v1653, %v1776
    %v1781 = vmul.f32 %v1777, %v430
    %v1782 = vmul.f32 %v1778, %v430
    %v1783 = vmul.f32 %v1779, %v430
    %v1784 = vmul.f32 %v1780, %v430
    %v1785 = vpack.c.bf16 %v1781, %v1781
    %v1786 = vpack.c.bf16 %v1782, %v1782
    %v1787 = vpack.c.bf16 %v1783, %v1783
    %v1788 = vpack.c.bf16 %v1784, %v1784
    %v1789 = vmul.f32 %v1682, %v1682
    %v1790 = vmul.f32 %v1684, %v1684
    %v1791 = vsel %vm368, %v1789, 0.0
    %1792 = vadd.xlane.f32.xlu0 %v1791
    %v1793 = vpop.xlane.xlu0 %1792
    %v1794 = vsel %vm368, %v1790, 0.0
    %1795 = vadd.xlane.f32.xlu0 %v1794
    %v1796 = vpop.xlane.xlu0 %1795
    %v1797 = vmax.f32 %v1793, 1e-24
    %v1798 = vmax.f32 %v1796, 1e-24
    %v1799 = vrsqrt.pop %v1797
    %v1800 = vmul.f32 %v1799, %v1797
    %v1801 = vmul.f32 %v1800, %v1799
    %v1802 = vmul.f32 0.5, %v1801
    %v1803 = vsub.f32 1.5, %v1802
    %v1804 = vmul.f32 %v1799, %v1803
    %vm1805 = vweird.f32 %v1797
    %vm1806 = vweird.f32 %v1799
    %vm1807 = vmor %vm1805, %vm1806
    %v1808 = vsel %vm1807, %v1799, %v1804
    %v1809 = vrsqrt.pop %v1798
    %v1810 = vmul.f32 %v1809, %v1798
    %v1811 = vmul.f32 %v1810, %v1809
    %v1812 = vmul.f32 0.5, %v1811
    %v1813 = vsub.f32 1.5, %v1812
    %v1814 = vmul.f32 %v1809, %v1813
    %vm1815 = vweird.f32 %v1798
    %vm1816 = vweird.f32 %v1809
    %vm1817 = vmor %vm1815, %vm1816
    %v1818 = vsel %vm1817, %v1809, %v1814
    %v1819 = vmul.f32 %v1682, %v1808
    %v1820 = vmul.f32 %v1684, %v1818
    %v1821 = vmul.f32 %v1819, %v473
    %v1822 = vmul.f32 %v1820, %v473
    %v1823 = vpack.c.bf16 %v1821, %v1821
    %v1824 = vpack.c.bf16 %v1822, %v1822
    %v1825 = vunpack.c.l.bf16 %v1785
    %v1826 = vunpack.c.l.bf16 %v1786
    %v1827 = vunpack.c.l.bf16 %v1787
    %v1828 = vunpack.c.l.bf16 %v1788
    %v1829 = vmul.f32 %v1825, %v483
    %v1830 = vmul.f32 %v1826, %v483
    %v1831 = vmul.f32 %v1827, %v483
    %v1832 = vmul.f32 %v1828, %v483
    %v1833 = vsel %vm368, %v1829, 0.0
    %1834 = vadd.xlane.f32.xlu0 %v1833
    %v1835 = vpop.xlane.xlu0 %1834
    %v1836 = vsel %vm368, %v1830, 0.0
    %1837 = vadd.xlane.f32.xlu0 %v1836
    %v1838 = vpop.xlane.xlu0 %1837
    %v1839 = vsel %vm368, %v1831, 0.0
    %1840 = vadd.xlane.f32.xlu0 %v1839
    %v1841 = vpop.xlane.xlu0 %1840
    %v1842 = vsel %vm368, %v1832, 0.0
    %1843 = vadd.xlane.f32.xlu0 %v1842
    %v1844 = vpop.xlane.xlu0 %1843
    %v1845 = vpack.c.bf16 %v1713, %v1713
    %v1846 = vpack.c.bf16 %v1715, %v1715
    %v1849 = vunpack.c.l.b16 %v1785
    %v1850 = vunpack.c.l.b16 %v1786
    %v1851 = vpack.c.b16 %v1850, %v1849
    %v1853 = vsel %vm368, %v1851, 0
    %v1856 = vsel %vm368, %v1823, 0
    %1858 = vmatpush.bf16.xpose.msra.mxu0 0
    %1859 = vmatpush.bf16.xpose.msra.mxu0 0
    %1860 = vmatpush.bf16.xpose.msra.mxu0 0
    %1861 = vmatpush.bf16.xpose.msra.mxu0 0
    %1862 = vmatpush.bf16.xpose.msra.mxu0 0
    %1863 = vmatpush.bf16.xpose.msra.mxu0 0
    %1864 = vmatpush.bf16.xpose.msra.mxu0 0
    %1865 = vmatpush.bf16.xpose.msra.mxu0 %v1856
    %1866 = vmatmul.bf16.gmra.mxu0 %v1853
    %v1867 = vpop.f32.mrf.mxu0
    %v1868 = vadd.f32 0.0, %v1867
    %v1869 = vpop.f32.mrf.mxu0
    %v1870 = vadd.f32 0.0, %v1869
    %1871 = vdwg.mxu0
    %v1874 = vunpack.c.l.b16 %v1787
    %v1875 = vunpack.c.l.b16 %v1788
    %v1876 = vpack.c.b16 %v1875, %v1874
    %v1878 = vsel %vm368, %v1876, 0
    %v1881 = vsel %vm368, %v1824, 0
    %1883 = vmatpush.bf16.xpose.msra.mxu0 0
    %1884 = vmatpush.bf16.xpose.msra.mxu0 0
    %1885 = vmatpush.bf16.xpose.msra.mxu0 0
    %1886 = vmatpush.bf16.xpose.msra.mxu0 0
    %1887 = vmatpush.bf16.xpose.msra.mxu0 0
    %1888 = vmatpush.bf16.xpose.msra.mxu0 0
    %1889 = vmatpush.bf16.xpose.msra.mxu0 0
    %1890 = vmatpush.bf16.xpose.msra.mxu0 %v1881
    %1891 = vmatmul.bf16.gmra.mxu0 %v1878
    %v1892 = vpop.f32.mrf.mxu0
    %v1893 = vadd.f32 0.0, %v1892
    %v1894 = vpop.f32.mrf.mxu0
    %v1895 = vadd.f32 0.0, %v1894
    %1896 = vdwg.mxu0
    %v1897 = vsel %vm555, %v1868, -3.4028235e+38
    %v1898 = vsel %vm555, %v1870, -3.4028235e+38
    %v1899 = vsel %vm556, %v1893, -3.4028235e+38
    %v1900 = vsel %vm556, %v1895, -3.4028235e+38
    %v1901 = vsel %vm561, %v1897, -inf
    %1902 = vmax.xlane.f32.xlu0 %v1901
    %v1903 = vpop.xlane.xlu0 %1902
    %v1904 = vsel %vm561, %v1898, -inf
    %1905 = vmax.xlane.f32.xlu0 %v1904
    %v1906 = vpop.xlane.xlu0 %1905
    %v1907 = vsel %vm561, %v1899, -inf
    %1908 = vmax.xlane.f32.xlu0 %v1907
    %v1909 = vpop.xlane.xlu0 %1908
    %v1910 = vsel %vm561, %v1900, -inf
    %1911 = vmax.xlane.f32.xlu0 %v1910
    %v1912 = vpop.xlane.xlu0 %1911
    %v1913 = vmax.f32 %v1903, %v1835
    %v1914 = vmax.f32 %v1906, %v1838
    %v1915 = vmax.f32 %v1909, %v1841
    %v1916 = vmax.f32 %v1912, %v1844
    %v1917 = vsub.f32 %v1897, %v1913
    %v1918 = vsub.f32 %v1898, %v1914
    %v1919 = vsub.f32 %v1899, %v1915
    %v1920 = vsub.f32 %v1900, %v1916
    %v1921 = vmul.f32 %v1917, 1.442695
    %v1922 = vpow.pop %v1921
    %v1923 = vmul.f32 %v1918, 1.442695
    %v1924 = vpow.pop %v1923
    %v1925 = vmul.f32 %v1919, 1.442695
    %v1926 = vpow.pop %v1925
    %v1927 = vmul.f32 %v1920, 1.442695
    %v1928 = vpow.pop %v1927
    %v1929 = vsub.f32 %v1835, %v1913
    %v1930 = vsub.f32 %v1838, %v1914
    %v1931 = vsub.f32 %v1841, %v1915
    %v1932 = vsub.f32 %v1844, %v1916
    %v1933 = vmul.f32 %v1929, 1.442695
    %v1934 = vpow.pop %v1933
    %v1935 = vmul.f32 %v1930, 1.442695
    %v1936 = vpow.pop %v1935
    %v1937 = vmul.f32 %v1931, 1.442695
    %v1938 = vpow.pop %v1937
    %v1939 = vmul.f32 %v1932, 1.442695
    %v1940 = vpow.pop %v1939
    %v1941 = vsel %vm561, %v1922, 0.0
    %1942 = vadd.xlane.f32.xlu0 %v1941
    %v1943 = vpop.xlane.xlu0 %1942
    %v1944 = vsel %vm561, %v1924, 0.0
    %1945 = vadd.xlane.f32.xlu0 %v1944
    %v1946 = vpop.xlane.xlu0 %1945
    %v1947 = vsel %vm561, %v1926, 0.0
    %1948 = vadd.xlane.f32.xlu0 %v1947
    %v1949 = vpop.xlane.xlu0 %1948
    %v1950 = vsel %vm561, %v1928, 0.0
    %1951 = vadd.xlane.f32.xlu0 %v1950
    %v1952 = vpop.xlane.xlu0 %1951
    %v1953 = vadd.f32 %v1943, %v1934
    %v1954 = vadd.f32 %v1946, %v1936
    %v1955 = vadd.f32 %v1949, %v1938
    %v1956 = vadd.f32 %v1952, %v1940
    %v1957 = vrcp.pop %v1953
    %v1958 = vrcp.pop %v1954
    %v1959 = vrcp.pop %v1955
    %v1960 = vrcp.pop %v1956
    %v1961 = vmul.f32 %v1922, %v1957
    %v1962 = vmul.f32 %v1924, %v1958
    %v1963 = vmul.f32 %v1926, %v1959
    %v1964 = vmul.f32 %v1928, %v1960
    %v1965 = vmul.f32 %v1934, %v1957
    %v1966 = vmul.f32 %v1936, %v1958
    %v1967 = vmul.f32 %v1938, %v1959
    %v1968 = vmul.f32 %v1940, %v1960
    %v1969 = vpack.c.bf16 %v1961, %v1961
    %v1970 = vpack.c.bf16 %v1962, %v1962
    %v1971 = vpack.c.bf16 %v1963, %v1963
    %v1972 = vpack.c.bf16 %v1964, %v1964
    %v1973 = vmul.f32 %v1965, %v635
    %v1974 = vmul.f32 %v1966, %v635
    %v1975 = vmul.f32 %v1967, %v635
    %v1976 = vmul.f32 %v1968, %v635
    %v1979 = vunpack.c.l.b16 %v1969
    %v1980 = vunpack.c.l.b16 %v1970
    %v1981 = vpack.c.b16 %v1980, %v1979
    %v1983 = vsel %vm561, %v1981, 0
    %v1986 = vsel %vm649, %v1845, 0
    %1988 = vmatpush.bf16.msra.mxu0 0
    %1989 = vmatpush.bf16.msra.mxu0 0
    %1990 = vmatpush.bf16.msra.mxu0 0
    %1991 = vmatpush.bf16.msra.mxu0 0
    %1992 = vmatpush.bf16.msra.mxu0 0
    %1993 = vmatpush.bf16.msra.mxu0 0
    %1994 = vmatpush.bf16.msra.mxu0 0
    %1995 = vmatpush.bf16.msra.mxu0 %v1986
    %1996 = vmatmul.bf16.gmra.mxu0 %v1983
    %v1997 = vpop.f32.mrf.mxu0
    %v1998 = vadd.f32 %v1973, %v1997
    %v1999 = vpop.f32.mrf.mxu0
    %v2000 = vadd.f32 %v1974, %v1999
    %2001 = vdwg.mxu0
    %v2004 = vunpack.c.l.b16 %v1971
    %v2005 = vunpack.c.l.b16 %v1972
    %v2006 = vpack.c.b16 %v2005, %v2004
    %v2008 = vsel %vm561, %v2006, 0
    %v2011 = vsel %vm649, %v1846, 0
    %2013 = vmatpush.bf16.msra.mxu0 0
    %2014 = vmatpush.bf16.msra.mxu0 0
    %2015 = vmatpush.bf16.msra.mxu0 0
    %2016 = vmatpush.bf16.msra.mxu0 0
    %2017 = vmatpush.bf16.msra.mxu0 0
    %2018 = vmatpush.bf16.msra.mxu0 0
    %2019 = vmatpush.bf16.msra.mxu0 0
    %2020 = vmatpush.bf16.msra.mxu0 %v2011
    %2021 = vmatmul.bf16.gmra.mxu0 %v2008
    %v2022 = vpop.f32.mrf.mxu0
    %v2023 = vadd.f32 %v1975, %v2022
    %v2024 = vpop.f32.mrf.mxu0
    %v2025 = vadd.f32 %v1976, %v2024
    %2026 = vdwg.mxu0
    %v2027 = vpack.c.bf16 %v2000, %v1998
    %v2028 = vpack.c.bf16 %v2025, %v2023
    %s2029 = scalar_lea.vmem %s6, 24
    %v2030 = vld [vmem:[%s2029] sm:$0xf]
    %v2031 = vld [vmem:[%s2029 + $0x4] sm:$0xf]
    %v2034 = vunpack.c.l.b16 %v2030
    %v2035 = vunpack.c.l.b16 %v2031
    %v2036 = vpack.c.b16 %v2035, %v2034
    %v2039 = vsel %vm368, %v2027, 0
    %v2042 = vsel %vm368, %v2028, 0
    %2044 = vmatpush.bf16.msra.mxu0 0
    %2045 = vmatpush.bf16.msra.mxu0 0
    %2046 = vmatpush.bf16.msra.mxu0 0
    %2047 = vmatpush.bf16.msra.mxu0 0
    %2048 = vmatpush.bf16.msra.mxu0 0
    %2049 = vmatpush.bf16.msra.mxu0 0
    %2050 = vmatpush.bf16.msra.mxu0 0
    %2051 = vmatpush.bf16.msra.mxu0 %v2036
    %2052 = vmatmul.bf16.gmra.mxu0 %v2039
    %v2053 = vpop.f32.mrf.mxu0
    %v2054 = vadd.f32 0.0, %v2053
    %v2055 = vpop.f32.mrf.mxu0
    %v2056 = vadd.f32 0.0, %v2055
    %2057 = vmatmul.bf16.gmra.mxu0 %v2042
    %v2058 = vpop.f32.mrf.mxu0
    %v2059 = vadd.f32 0.0, %v2058
    %v2060 = vpop.f32.mrf.mxu0
    %v2061 = vadd.f32 0.0, %v2060
    %2062 = vdwg.mxu0
    %v2063 = vadd.f32 %v1615, %v2054
    %v2064 = vadd.f32 %v1616, %v2056
    %v2065 = vadd.f32 %v1617, %v2059
    %v2066 = vadd.f32 %v1618, %v2061
    %v2067 = vld [vmem:[%s12] sm:$0x1]
    %v2068 = vsel %vm51, %v2063, -inf
    %2069 = vmax.xlane.f32.xlu0 %v2068
    %v2070 = vpop.xlane.xlu0 %2069
    %v2071 = vsel %vm51, %v2064, -inf
    %2072 = vmax.xlane.f32.xlu0 %v2071
    %v2073 = vpop.xlane.xlu0 %2072
    %v2074 = vsel %vm51, %v2065, -inf
    %2075 = vmax.xlane.f32.xlu0 %v2074
    %v2076 = vpop.xlane.xlu0 %2075
    %v2077 = vsel %vm51, %v2066, -inf
    %2078 = vmax.xlane.f32.xlu0 %v2077
    %v2079 = vpop.xlane.xlu0 %2078
    %v2080 = vrcp.pop %v2070
    %v2081 = vmul.f32 %v2070, %v2080
    %v2082 = vsub.f32 1.0, %v2081
    %v2083 = vmul.f32 %v2080, %v2082
    %v2084 = vadd.f32 %v2080, %v2083
    %vm2085 = vweird.f32 %v2070
    %vm2086 = vweird.f32 %v2080
    %vm2087 = vmor %vm2085, %vm2086
    %v2088 = vsel %vm2087, %v2080, %v2084
    %v2089 = vand.u32 2147483647, %v2070
    %vm2090 = vcmp.eq.f32.partialorder %v2089, 8.507059e+37
    %v2091 = vand.u32 %v2070, 2147483648
    %v2092 = vor.u32 1.1754944e-38, %v2091
    %v2093 = vsel %vm2090, %v2092, %v2088
    %v2094 = vmul.f32 %v2063, %v2093
    %v2095 = vrcp.pop %v2073
    %v2096 = vmul.f32 %v2073, %v2095
    %v2097 = vsub.f32 1.0, %v2096
    %v2098 = vmul.f32 %v2095, %v2097
    %v2099 = vadd.f32 %v2095, %v2098
    %vm2100 = vweird.f32 %v2073
    %vm2101 = vweird.f32 %v2095
    %vm2102 = vmor %vm2100, %vm2101
    %v2103 = vsel %vm2102, %v2095, %v2099
    %v2104 = vand.u32 2147483647, %v2073
    %vm2105 = vcmp.eq.f32.partialorder %v2104, 8.507059e+37
    %v2106 = vand.u32 %v2073, 2147483648
    %v2107 = vor.u32 1.1754944e-38, %v2106
    %v2108 = vsel %vm2105, %v2107, %v2103
    %v2109 = vmul.f32 %v2064, %v2108
    %v2110 = vrcp.pop %v2076
    %v2111 = vmul.f32 %v2076, %v2110
    %v2112 = vsub.f32 1.0, %v2111
    %v2113 = vmul.f32 %v2110, %v2112
    %v2114 = vadd.f32 %v2110, %v2113
    %vm2115 = vweird.f32 %v2076
    %vm2116 = vweird.f32 %v2110
    %vm2117 = vmor %vm2115, %vm2116
    %v2118 = vsel %vm2117, %v2110, %v2114
    %v2119 = vand.u32 2147483647, %v2076
    %vm2120 = vcmp.eq.f32.partialorder %v2119, 8.507059e+37
    %v2121 = vand.u32 %v2076, 2147483648
    %v2122 = vor.u32 1.1754944e-38, %v2121
    %v2123 = vsel %vm2120, %v2122, %v2118
    %v2124 = vmul.f32 %v2065, %v2123
    %v2125 = vrcp.pop %v2079
    %v2126 = vmul.f32 %v2079, %v2125
    %v2127 = vsub.f32 1.0, %v2126
    %v2128 = vmul.f32 %v2125, %v2127
    %v2129 = vadd.f32 %v2125, %v2128
    %vm2130 = vweird.f32 %v2079
    %vm2131 = vweird.f32 %v2125
    %vm2132 = vmor %vm2130, %vm2131
    %v2133 = vsel %vm2132, %v2125, %v2129
    %v2134 = vand.u32 2147483647, %v2079
    %vm2135 = vcmp.eq.f32.partialorder %v2134, 8.507059e+37
    %v2136 = vand.u32 %v2079, 2147483648
    %v2137 = vor.u32 1.1754944e-38, %v2136
    %v2138 = vsel %vm2135, %v2137, %v2133
    %v2139 = vmul.f32 %v2066, %v2138
    %v2140 = vsel %vm51, %v2094, 0.0
    %2141 = vadd.xlane.f32.xlu0 %v2140
    %v2142 = vpop.xlane.xlu0 %2141
    %v2143 = vsel %vm51, %v2109, 0.0
    %2144 = vadd.xlane.f32.xlu0 %v2143
    %v2145 = vpop.xlane.xlu0 %2144
    %v2146 = vsel %vm51, %v2124, 0.0
    %2147 = vadd.xlane.f32.xlu0 %v2146
    %v2148 = vpop.xlane.xlu0 %2147
    %v2149 = vsel %vm51, %v2139, 0.0
    %2150 = vadd.xlane.f32.xlu0 %v2149
    %v2151 = vpop.xlane.xlu0 %2150
    %v2152 = vmul.f32 %v2142, %v142
    %v2153 = vmul.f32 %v2145, %v142
    %v2154 = vmul.f32 %v2148, %v142
    %v2155 = vmul.f32 %v2151, %v142
    %v2156 = vsub.f32 %v2094, %v2152
    %v2157 = vsub.f32 %v2109, %v2153
    %v2158 = vsub.f32 %v2124, %v2154
    %v2159 = vsub.f32 %v2139, %v2155
    %v2160 = vmul.f32 %v2156, %v2156
    %v2161 = vmul.f32 %v2157, %v2157
    %v2162 = vmul.f32 %v2158, %v2158
    %v2163 = vmul.f32 %v2159, %v2159
    %v2164 = vsel %vm51, %v2160, 0.0
    %2165 = vadd.xlane.f32.xlu0 %v2164
    %v2166 = vpop.xlane.xlu0 %2165
    %v2167 = vsel %vm51, %v2161, 0.0
    %2168 = vadd.xlane.f32.xlu0 %v2167
    %v2169 = vpop.xlane.xlu0 %2168
    %v2170 = vsel %vm51, %v2162, 0.0
    %2171 = vadd.xlane.f32.xlu0 %v2170
    %v2172 = vpop.xlane.xlu0 %2171
    %v2173 = vsel %vm51, %v2163, 0.0
    %2174 = vadd.xlane.f32.xlu0 %v2173
    %v2175 = vpop.xlane.xlu0 %2174
    %v2176 = vmul.f32 %v2166, %v142
    %v2177 = vmul.f32 %v2169, %v142
    %v2178 = vmul.f32 %v2172, %v142
    %v2179 = vmul.f32 %v2175, %v142
    %v2180 = vadd.f32 %v2176, 1e-05
    %v2181 = vadd.f32 %v2177, 1e-05
    %v2182 = vadd.f32 %v2178, 1e-05
    %v2183 = vadd.f32 %v2179, 1e-05
    %v2184 = vrsqrt.pop %v2180
    %v2185 = vmul.f32 %v2184, %v2180
    %v2186 = vmul.f32 %v2185, %v2184
    %v2187 = vmul.f32 0.5, %v2186
    %v2188 = vsub.f32 1.5, %v2187
    %v2189 = vmul.f32 %v2184, %v2188
    %vm2190 = vweird.f32 %v2180
    %vm2191 = vweird.f32 %v2184
    %vm2192 = vmor %vm2190, %vm2191
    %v2193 = vsel %vm2192, %v2184, %v2189
    %v2194 = vrsqrt.pop %v2181
    %v2195 = vmul.f32 %v2194, %v2181
    %v2196 = vmul.f32 %v2195, %v2194
    %v2197 = vmul.f32 0.5, %v2196
    %v2198 = vsub.f32 1.5, %v2197
    %v2199 = vmul.f32 %v2194, %v2198
    %vm2200 = vweird.f32 %v2181
    %vm2201 = vweird.f32 %v2194
    %vm2202 = vmor %vm2200, %vm2201
    %v2203 = vsel %vm2202, %v2194, %v2199
    %v2204 = vrsqrt.pop %v2182
    %v2205 = vmul.f32 %v2204, %v2182
    %v2206 = vmul.f32 %v2205, %v2204
    %v2207 = vmul.f32 0.5, %v2206
    %v2208 = vsub.f32 1.5, %v2207
    %v2209 = vmul.f32 %v2204, %v2208
    %vm2210 = vweird.f32 %v2182
    %vm2211 = vweird.f32 %v2204
    %vm2212 = vmor %vm2210, %vm2211
    %v2213 = vsel %vm2212, %v2204, %v2209
    %v2214 = vrsqrt.pop %v2183
    %v2215 = vmul.f32 %v2214, %v2183
    %v2216 = vmul.f32 %v2215, %v2214
    %v2217 = vmul.f32 0.5, %v2216
    %v2218 = vsub.f32 1.5, %v2217
    %v2219 = vmul.f32 %v2214, %v2218
    %vm2220 = vweird.f32 %v2183
    %vm2221 = vweird.f32 %v2214
    %vm2222 = vmor %vm2220, %vm2221
    %v2223 = vsel %vm2222, %v2214, %v2219
    %v2224 = vmul.f32 %v2156, %v2193
    %v2225 = vmul.f32 %v2157, %v2203
    %v2226 = vmul.f32 %v2158, %v2213
    %v2227 = vmul.f32 %v2159, %v2223
    %v2229 = vperm.slane %v2067, 0
    %v2231 = vmul.f32 %v2224, %v2229
    %v2232 = vmul.f32 %v2225, %v2229
    %v2233 = vmul.f32 %v2226, %v2229
    %v2234 = vmul.f32 %v2227, %v2229
    %2235 = vst.msk [vmem:[#allocation2] sm:$0xff] %vm51, %v2231
    %2236 = vst.msk [vmem:[#allocation2 + $0x8] sm:$0xff] %vm51, %v2232
    %2237 = vst.msk [vmem:[#allocation2 + $0x10] sm:$0xff] %vm51, %v2233
    %2238 = vst.msk [vmem:[#allocation2 + $0x18] sm:$0xff] %vm51, %v2234
    // Predicated region
    $region54: #{tpu_custom_call.1} parent=1 // pred_check
      _
    $region55: #{tpu_custom_call.1} parent=1 // pred_check_branch
      %2240 = sbr.rel (0) target = $region57
    $region56: #{tpu_custom_call.1} parent=1 // pred_region
      %2242 = vsyncadd [#allocation3], 0
      %s2243 = sshll.u32 [#allocation2], 4
      %s2244 = int_to_ptr.vmem [resolvable:$true] %s2243
      %s2245 = sshll.u32 %s13, 4
      %s2246 = int_to_ptr.hbm [resolvable:$true] %s2245
      %2251 = dma.vmem_to_hbm [thread:$0]  %s2244, 512, %s2246, [#allocation3], 128, 128, 8
    $region57: #{tpu_custom_call.1} parent=1 // pred_fallthru
      _
    // Predicated region
    $region58: #{tpu_custom_call.1} parent=1 // pred_check
      _
    $region59: #{tpu_custom_call.1} parent=1 // pred_check_branch
      %2253 = sbr.rel (0) target = $region61
    $region60: #{tpu_custom_call.1} parent=1 // pred_region
      %2255 = dma.done [#allocation3], 512
    $region61: #{tpu_custom_call.1} parent=1 // pred_fallthru
      _
    %2256 = vsyncpa [#allocation3], 1

</llo_original>
